<compile_context>
chip_gen: v5e
topology: v5e:2x2
jax: 0.10.0
libtpu: 0.0.40
codegen_flags: <defaults>
</compile_context>

<pallas_src>
import functools

import jax
import jax.numpy as jnp
from jax.experimental import pallas as pl
from jax.experimental.pallas import tpu as pltpu

_OUT_LANES = 8  # last dim of the output slab; wrapper slices back to 1 column


def _mlp_attention_kernel(scal_ref, x_ref, vec_ref, w0_ref, ex_ref, w1_ref,
                          w2_ref, out_ref):
    """One batch tile: (bt, N*D) lane-dense input -> (bt, 8) output slab."""
    h2dim = w2_ref.shape[1]
    b0 = scal_ref[0]          # fc0 bias (scalar, SMEM)
    bo = scal_ref[1]          # output bias (scalar, SMEM)

    x = x_ref[...]            # (bt, N*D) f32, lane-dense

    # --- fc0 + softmax over the stacked axis (MXU matmul + lane reductions) ---
    # w0_ref is block-diagonal: w0[i*D+j, i] = fc0_w[j]  =>  x @ w0 == per-row fc0.
    logits = jnp.dot(x, w0_ref[...], preferred_element_type=jnp.float32) + b0   # (bt, N)
    m = jnp.max(logits, axis=-1, keepdims=True)
    p = jnp.exp(logits - m)
    align = p / jnp.sum(p, axis=-1, keepdims=True)                              # (bt, N)

    # --- hidden0 folded into fc1: (x * expand(align)) @ tile(W1^T, N) ---------
    # ex_ref[i, i*D+j] = 1 expands align from (bt, N) to (bt, N*D) on the MXU.
    align_exp = jnp.dot(align, ex_ref[...], preferred_element_type=jnp.float32)  # (bt, N*D)
    h1 = jnp.dot(x * align_exp, w1_ref[...], preferred_element_type=jnp.float32)  # (bt, H)

    # --- fc1 bias + ReLU + LayerNorm(H) (eps=1e-5, biased var, single pass) ---
    h1 = jnp.maximum(h1 + vec_ref[0:1, :], 0.0)
    mu1 = jnp.mean(h1, axis=-1, keepdims=True)
    var1 = jnp.mean(h1 * h1, axis=-1, keepdims=True) - mu1 * mu1
    h1 = (h1 - mu1) * jax.lax.rsqrt(var1 + 1e-5)
    h1 = h1 * vec_ref[1:2, :] + vec_ref[2:3, :]

    # --- fc2 + ReLU + LayerNorm(H // 2) ---------------------------------------
    h2 = jnp.dot(h1, w2_ref[...], preferred_element_type=jnp.float32)           # (bt, H2)
    h2 = jnp.maximum(h2 + vec_ref[3:4, 0:h2dim], 0.0)
    mu2 = jnp.mean(h2, axis=-1, keepdims=True)
    var2 = jnp.mean(h2 * h2, axis=-1, keepdims=True) - mu2 * mu2
    h2 = (h2 - mu2) * jax.lax.rsqrt(var2 + 1e-5)
    h2 = h2 * vec_ref[4:5, 0:h2dim] + vec_ref[5:6, 0:h2dim]

    # --- output linear (H//2 -> 1), narrow lane store --------------------------
    out = jnp.sum(h2 * vec_ref[6:7, 0:h2dim], axis=-1, keepdims=True) + bo      # (bt, 1)
    out_ref[...] = jnp.broadcast_to(out, out_ref.shape)                         # (bt, 8)


def pack_params(params, stacked_dim, dtype=jnp.float32):
    """One-time parameter packing / algebraic fusion. Keep OUT of the hot path."""
    n = int(stacked_dim)
    fc0_w = jnp.asarray(params["fc0_w"], dtype).reshape(-1)    # (D,)
    fc1_w = jnp.asarray(params["fc1_w"], dtype)                # (H, D)
    fc2_w = jnp.asarray(params["fc2_w"], dtype)                # (H2, H)
    hdim, d = fc1_w.shape
    h2dim = fc2_w.shape[0]
    assert hdim >= h2dim, "packing assumes hidden_dim >= hidden_dim // 2"

    eye_n = jnp.eye(n, dtype=dtype)
    # Block-diagonal fc0 weight: (N*D, N), w0blk[i*D+j, i] = fc0_w[j].
    w0blk = jnp.kron(eye_n, fc0_w.reshape(d, 1))
    # One-hot align expander: (N, N*D), expand[i, i*D+j] = 1.
    expand = jnp.kron(eye_n, jnp.ones((1, d), dtype))
    # fc1 weight^T replicated per stacked row so hidden0 folds into one matmul.
    w1x = jnp.tile(fc1_w.T, (n, 1))                            # (N*D, H)

    def row(v):
        v = jnp.asarray(v, dtype).reshape(1, -1)
        return jnp.pad(v, ((0, 0), (0, hdim - v.shape[1])))

    vec_slab = jnp.concatenate(
        [row(params["fc1_b"]),          # 0
         row(params["ln1_g"]),          # 1
         row(params["ln1_b"]),          # 2
         row(params["fc2_b"]),          # 3 (first H//2 lanes valid)
         row(params["ln2_g"]),          # 4
         row(params["ln2_b"]),          # 5
         row(params["out_w"]),          # 6 (first H//2 lanes valid)
         jnp.zeros((1, hdim), dtype)],  # 7 pad to 8 sublanes
        axis=0)                                                # (8, H)

    scalars = jnp.stack([jnp.asarray(params["fc0_b"], dtype).reshape(()),
                         jnp.asarray(params["out_b"], dtype).reshape(())])

    return {"vec": vec_slab, "w0blk": w0blk, "expand": expand,
            "w1x": w1x, "w2t": fc2_w.T, "scalars": scalars}


def _round_up(a, b):
    return (a + b - 1) // b * b


def _choose_block(b, block_b):
    if b <= block_b:
        return b
    # At least 2 grid steps once b exceeds one block (one per v7x TensorCore);
    # naturally many more for large batches.  Keep a multiple of 8 sublanes.
    return max(8, min(block_b, _round_up(pl.cdiv(b, 2), 8)))


def mlp_attention_forward(arrays, packed, *, block_b=1024):
    """arrays: (B, N, D) batch of stacked inputs (or a single (N, D) instance).

    Returns (B, 1) float32 (or (1, 1) for a single instance)."""
    x = jnp.asarray(arrays, jnp.float32)
    if x.ndim == 2:
        x = x[None]
    b, n, d = x.shape

    vec, scal = packed["vec"], packed["scalars"]
    w0blk, expand = packed["w0blk"], packed["expand"]
    w1x, w2t = packed["w1x"], packed["w2t"]
    nd, n_packed = w0blk.shape
    hdim, h2dim = w2t.shape
    assert n == n_packed and n * d == nd, "input shape does not match packed params"

    x2d = x.reshape(b, nd)               # free reshape: lane-dense (B, N*D)

    bt = _choose_block(b, block_b)
    grid = pl.cdiv(b, bt)                # trailing partial block OK; no wrapper pad

    out = pl.pallas_call(
        _mlp_attention_kernel,
        grid=(grid,),
        in_specs=[
            pl.BlockSpec(memory_space=pltpu.MemorySpace.SMEM),      # 2 scalar biases
            pl.BlockSpec((bt, nd), lambda i: (i, 0)),               # batch tile of x
            pl.BlockSpec((8, hdim), lambda i: (0, 0)),              # packed row vectors
            pl.BlockSpec((nd, n), lambda i: (0, 0)),                # block-diag fc0 weight
            pl.BlockSpec((n, nd), lambda i: (0, 0)),                # align expander
            pl.BlockSpec((nd, hdim), lambda i: (0, 0)),             # tiled fc1 weight^T
            pl.BlockSpec((hdim, h2dim), lambda i: (0, 0)),          # fc2 weight^T
        ],
        out_specs=pl.BlockSpec((bt, _OUT_LANES), lambda i: (i, 0)),
        out_shape=jax.ShapeDtypeStruct((b, _OUT_LANES), jnp.float32),
        compiler_params=pltpu.CompilerParams(
            dimension_semantics=("parallel",),
            vmem_limit_bytes=32 << 20),
    )(scal, x2d, vec, w0blk, expand, w1x, w2t)
    return out[:, :1]


def _layernorm(v, g, b, eps=1e-5):
    mu = jnp.mean(v, axis=-1, keepdims=True)
    var = jnp.mean(jnp.square(v - mu), axis=-1, keepdims=True)
    return (v - mu) * jax.lax.rsqrt(var + eps) * g + b


def reference(arrays, params):
    """Pure-JAX single-instance reference mirroring the (intended) PyTorch forward."""
    logits = arrays @ params["fc0_w"].T + params["fc0_b"]            # (N, 1)
    align = jax.nn.softmax(logits, axis=0)                           # (N, 1)
    hidden0 = arrays.T @ align                                       # (D, 1)
    h1 = hidden0.T @ params["fc1_w"].T + params["fc1_b"]             # (1, H)
    h1 = _layernorm(jnp.maximum(h1, 0.0), params["ln1_g"], params["ln1_b"])
    h2 = h1 @ params["fc2_w"].T + params["fc2_b"]                    # (1, H//2)
    h2 = _layernorm(jnp.maximum(h2, 0.0), params["ln2_g"], params["ln2_b"])
    return h2 @ params["out_w"].T + params["out_b"]                  # (1, 1)


if __name__ == "__main__":
    N, D, H = 8, 32, 256          # stacked rows, input_dim, hidden_dim
    H2 = H // 2
    B = 200                       # not a multiple of the tile -> exercises partial trailing block
    key = jax.random.PRNGKey(0)
    ks = jax.random.split(key, 12)

    arrays = jax.random.normal(ks[0], (B, N, D), dtype=jnp.float32)
    params = {
        "fc0_w": 0.1 * jax.random.normal(ks[1], (1, D), dtype=jnp.float32),
        "fc0_b": jnp.full((1,), 0.01, jnp.float32),
        "fc1_w": 0.1 * jax.random.normal(ks[2], (H, D), dtype=jnp.float32),
        "fc1_b": 0.1 * jax.random.normal(ks[3], (H,), dtype=jnp.float32),
        "ln1_g": 1.0 + 0.1 * jax.random.normal(ks[4], (H,), dtype=jnp.float32),
        "ln1_b": 0.1 * jax.random.normal(ks[5], (H,), dtype=jnp.float32),
        "fc2_w": 0.1 * jax.random.normal(ks[6], (H2, H), dtype=jnp.float32),
        "fc2_b": 0.1 * jax.random.normal(ks[7], (H2,), dtype=jnp.float32),
        "ln2_g": 1.0 + 0.1 * jax.random.normal(ks[8], (H2,), dtype=jnp.float32),
        "ln2_b": 0.1 * jax.random.normal(ks[9], (H2,), dtype=jnp.float32),
        "out_w": 0.1 * jax.random.normal(ks[10], (1, H2), dtype=jnp.float32),
        "out_b": jnp.full((1,), -0.02, jnp.float32),
    }

    packed = pack_params(params, stacked_dim=N)   # one-time packing, outside the hot path
    # Small block_b in the demo so the grid has several steps plus a partial
    # trailing block; production default is block_b=1024 (sweep 512-2048).
    run = jax.jit(functools.partial(mlp_attention_forward, packed=packed, block_b=64))

    out = run(arrays)
    jax.block_until_ready(out)

    ref = jax.vmap(lambda a: reference(a, params))(arrays).reshape(B, 1)
    assert out.shape == (B, 1), out.shape
    max_err = jnp.max(jnp.abs(out - ref))
    assert jnp.allclose(out, ref, atol=2e-4, rtol=2e-4), ("max_abs_err", max_err)
    print("KERNEL_OK")
</pallas_src>

<mosaic_0001>
module attributes {stable_mosaic.version = 11 : i64} {
  func.func @_mlp_attention_kernel(%arg0: i32, %arg1: memref<2xf32, #tpu.memory_space<smem>>, %arg2: memref<64x256xf32, #tpu.memory_space<vmem>>, %arg3: memref<8x256xf32, #tpu.memory_space<vmem>>, %arg4: memref<256x8xf32, #tpu.memory_space<vmem>>, %arg5: memref<8x256xf32, #tpu.memory_space<vmem>>, %arg6: memref<256x256xf32, #tpu.memory_space<vmem>>, %arg7: memref<256x128xf32, #tpu.memory_space<vmem>>, %arg8: memref<64x8xf32, #tpu.memory_space<vmem>>) attributes {dimension_semantics = [#tpu.dimension_semantics<parallel>], iteration_bounds = array<i64: 4>, scalar_prefetch = 0 : i64, scratch_operands = 0 : i64, tpu.core_type = #tpu.core_type<tc>, window_params = [{transform_indices = @transform_0, window_bounds = array<i64: 2>}, {transform_indices = @transform_1, window_bounds = array<i64: 64, 256>}, {pipeline_mode = #tpu.pipeline_mode<synchronous>, transform_indices = @transform_2, window_bounds = array<i64: 8, 256>}, {pipeline_mode = #tpu.pipeline_mode<synchronous>, transform_indices = @transform_3, window_bounds = array<i64: 256, 8>}, {pipeline_mode = #tpu.pipeline_mode<synchronous>, transform_indices = @transform_4, window_bounds = array<i64: 8, 256>}, {pipeline_mode = #tpu.pipeline_mode<synchronous>, transform_indices = @transform_5, window_bounds = array<i64: 256, 256>}, {pipeline_mode = #tpu.pipeline_mode<synchronous>, transform_indices = @transform_6, window_bounds = array<i64: 256, 128>}, {transform_indices = @transform_7, window_bounds = array<i64: 64, 8>}]} {
    %c0 = arith.constant 0 : index
    %0 = memref.load %arg1[%c0] : memref<2xf32, #tpu.memory_space<smem>>
    %c1 = arith.constant 1 : index
    %1 = memref.load %arg1[%c1] : memref<2xf32, #tpu.memory_space<smem>>
    %c0_0 = arith.constant 0 : index
    %c0_1 = arith.constant 0 : index
    %2 = vector.load %arg2[%c0_0, %c0_1] : memref<64x256xf32, #tpu.memory_space<vmem>>, vector<64x256xf32>
    %c0_2 = arith.constant 0 : index
    %c0_3 = arith.constant 0 : index
    %3 = vector.load %arg4[%c0_2, %c0_3] : memref<256x8xf32, #tpu.memory_space<vmem>>, vector<256x8xf32>
    %cst = arith.constant dense<0.000000e+00> : vector<64x8xf32>
    %4 = tpu.matmul %2, %3, %cst {dimension_numbers = #tpu.dot_dimension_numbers<[1], [0], [0], [1], [0, 0, 1, 1], [], []>} : vector<64x256xf32>, vector<256x8xf32>, vector<64x8xf32> -> vector<64x8xf32>
    %5 = vector.broadcast %0 : f32 to vector<64x8xf32>
    %6 = arith.addf %4, %5 : vector<64x8xf32>
    %cst_4 = arith.constant dense<0xFF800000> : vector<64xf32>
    %7 = vector.multi_reduction <maximumf>, %6, %cst_4 [1] : vector<64x8xf32> to vector<64xf32>
    %8 = vector.shape_cast %7 : vector<64xf32> to vector<64x1xf32>
    %9 = vector.broadcast %8 : vector<64x1xf32> to vector<64x8xf32>
    %10 = arith.subf %6, %9 : vector<64x8xf32>
    %11 = math.exp %10 : vector<64x8xf32>
    %cst_5 = arith.constant dense<0.000000e+00> : vector<64xf32>
    %12 = vector.multi_reduction <add>, %11, %cst_5 [1] : vector<64x8xf32> to vector<64xf32>
    %13 = vector.shape_cast %12 : vector<64xf32> to vector<64x1xf32>
    %14 = vector.broadcast %13 : vector<64x1xf32> to vector<64x8xf32>
    %15 = arith.divf %11, %14 : vector<64x8xf32>
    %c0_6 = arith.constant 0 : index
    %c0_7 = arith.constant 0 : index
    %16 = vector.load %arg5[%c0_6, %c0_7] : memref<8x256xf32, #tpu.memory_space<vmem>>, vector<8x256xf32>
    %cst_8 = arith.constant dense<0.000000e+00> : vector<64x256xf32>
    %17 = tpu.matmul %15, %16, %cst_8 {dimension_numbers = #tpu.dot_dimension_numbers<[1], [0], [0], [1], [0, 0, 1, 1], [], []>} : vector<64x8xf32>, vector<8x256xf32>, vector<64x256xf32> -> vector<64x256xf32>
    %18 = arith.mulf %2, %17 : vector<64x256xf32>
    %c0_9 = arith.constant 0 : index
    %c0_10 = arith.constant 0 : index
    %19 = vector.load %arg6[%c0_9, %c0_10] : memref<256x256xf32, #tpu.memory_space<vmem>>, vector<256x256xf32>
    %cst_11 = arith.constant dense<0.000000e+00> : vector<64x256xf32>
    %20 = tpu.matmul %18, %19, %cst_11 {dimension_numbers = #tpu.dot_dimension_numbers<[1], [0], [0], [1], [0, 0, 1, 1], [], []>} : vector<64x256xf32>, vector<256x256xf32>, vector<64x256xf32> -> vector<64x256xf32>
    %c0_12 = arith.constant 0 : index
    %c0_13 = arith.constant 0 : index
    %21 = vector.load %arg3[%c0_12, %c0_13] : memref<8x256xf32, #tpu.memory_space<vmem>>, vector<1x256xf32>
    %22 = vector.broadcast %21 : vector<1x256xf32> to vector<64x256xf32>
    %23 = arith.addf %20, %22 : vector<64x256xf32>
    %cst_14 = arith.constant 0.000000e+00 : f32
    %24 = vector.broadcast %cst_14 : f32 to vector<64x256xf32>
    %25 = arith.maximumf %23, %24 : vector<64x256xf32>
    %cst_15 = arith.constant dense<0.000000e+00> : vector<64xf32>
    %26 = vector.multi_reduction <add>, %25, %cst_15 [1] : vector<64x256xf32> to vector<64xf32>
    %27 = vector.shape_cast %26 : vector<64xf32> to vector<64x1xf32>
    %cst_16 = arith.constant 2.560000e+02 : f32
    %28 = vector.broadcast %cst_16 : f32 to vector<64x1xf32>
    %29 = arith.divf %27, %28 : vector<64x1xf32>
    %30 = arith.mulf %25, %25 : vector<64x256xf32>
    %cst_17 = arith.constant dense<0.000000e+00> : vector<64xf32>
    %31 = vector.multi_reduction <add>, %30, %cst_17 [1] : vector<64x256xf32> to vector<64xf32>
    %32 = vector.shape_cast %31 : vector<64xf32> to vector<64x1xf32>
    %cst_18 = arith.constant 2.560000e+02 : f32
    %33 = vector.broadcast %cst_18 : f32 to vector<64x1xf32>
    %34 = arith.divf %32, %33 : vector<64x1xf32>
    %35 = arith.mulf %29, %29 : vector<64x1xf32>
    %36 = arith.subf %34, %35 : vector<64x1xf32>
    %37 = vector.broadcast %29 : vector<64x1xf32> to vector<64x256xf32>
    %38 = arith.subf %25, %37 : vector<64x256xf32>
    %cst_19 = arith.constant 9.99999974E-6 : f32
    %39 = vector.broadcast %cst_19 : f32 to vector<64x1xf32>
    %40 = arith.addf %36, %39 : vector<64x1xf32>
    %41 = math.rsqrt %40 : vector<64x1xf32>
    %42 = vector.broadcast %41 : vector<64x1xf32> to vector<64x256xf32>
    %43 = arith.mulf %38, %42 : vector<64x256xf32>
    %c1_20 = arith.constant 1 : index
    %c0_21 = arith.constant 0 : index
    %44 = vector.load %arg3[%c1_20, %c0_21] : memref<8x256xf32, #tpu.memory_space<vmem>>, vector<1x256xf32>
    %45 = vector.broadcast %44 : vector<1x256xf32> to vector<64x256xf32>
    %46 = arith.mulf %43, %45 : vector<64x256xf32>
    %c2 = arith.constant 2 : index
    %c0_22 = arith.constant 0 : index
    %47 = vector.load %arg3[%c2, %c0_22] : memref<8x256xf32, #tpu.memory_space<vmem>>, vector<1x256xf32>
    %48 = vector.broadcast %47 : vector<1x256xf32> to vector<64x256xf32>
    %49 = arith.addf %46, %48 : vector<64x256xf32>
    %c0_23 = arith.constant 0 : index
    %c0_24 = arith.constant 0 : index
    %50 = vector.load %arg7[%c0_23, %c0_24] : memref<256x128xf32, #tpu.memory_space<vmem>>, vector<256x128xf32>
    %cst_25 = arith.constant dense<0.000000e+00> : vector<64x128xf32>
    %51 = tpu.matmul %49, %50, %cst_25 {dimension_numbers = #tpu.dot_dimension_numbers<[1], [0], [0], [1], [0, 0, 1, 1], [], []>} : vector<64x256xf32>, vector<256x128xf32>, vector<64x128xf32> -> vector<64x128xf32>
    %c3 = arith.constant 3 : index
    %c0_26 = arith.constant 0 : index
    %52 = vector.load %arg3[%c3, %c0_26] : memref<8x256xf32, #tpu.memory_space<vmem>>, vector<1x128xf32>
    %53 = vector.broadcast %52 : vector<1x128xf32> to vector<64x128xf32>
    %54 = arith.addf %51, %53 : vector<64x128xf32>
    %cst_27 = arith.constant 0.000000e+00 : f32
    %55 = vector.broadcast %cst_27 : f32 to vector<64x128xf32>
    %56 = arith.maximumf %54, %55 : vector<64x128xf32>
    %cst_28 = arith.constant dense<0.000000e+00> : vector<64xf32>
    %57 = vector.multi_reduction <add>, %56, %cst_28 [1] : vector<64x128xf32> to vector<64xf32>
    %58 = vector.shape_cast %57 : vector<64xf32> to vector<64x1xf32>
    %cst_29 = arith.constant 1.280000e+02 : f32
    %59 = vector.broadcast %cst_29 : f32 to vector<64x1xf32>
    %60 = arith.divf %58, %59 : vector<64x1xf32>
    %61 = arith.mulf %56, %56 : vector<64x128xf32>
    %cst_30 = arith.constant dense<0.000000e+00> : vector<64xf32>
    %62 = vector.multi_reduction <add>, %61, %cst_30 [1] : vector<64x128xf32> to vector<64xf32>
    %63 = vector.shape_cast %62 : vector<64xf32> to vector<64x1xf32>
    %cst_31 = arith.constant 1.280000e+02 : f32
    %64 = vector.broadcast %cst_31 : f32 to vector<64x1xf32>
    %65 = arith.divf %63, %64 : vector<64x1xf32>
    %66 = arith.mulf %60, %60 : vector<64x1xf32>
    %67 = arith.subf %65, %66 : vector<64x1xf32>
    %68 = vector.broadcast %60 : vector<64x1xf32> to vector<64x128xf32>
    %69 = arith.subf %56, %68 : vector<64x128xf32>
    %cst_32 = arith.constant 9.99999974E-6 : f32
    %70 = vector.broadcast %cst_32 : f32 to vector<64x1xf32>
    %71 = arith.addf %67, %70 : vector<64x1xf32>
    %72 = math.rsqrt %71 : vector<64x1xf32>
    %73 = vector.broadcast %72 : vector<64x1xf32> to vector<64x128xf32>
    %74 = arith.mulf %69, %73 : vector<64x128xf32>
    %c4 = arith.constant 4 : index
    %c0_33 = arith.constant 0 : index
    %75 = vector.load %arg3[%c4, %c0_33] : memref<8x256xf32, #tpu.memory_space<vmem>>, vector<1x128xf32>
    %76 = vector.broadcast %75 : vector<1x128xf32> to vector<64x128xf32>
    %77 = arith.mulf %74, %76 : vector<64x128xf32>
    %c5 = arith.constant 5 : index
    %c0_34 = arith.constant 0 : index
    %78 = vector.load %arg3[%c5, %c0_34] : memref<8x256xf32, #tpu.memory_space<vmem>>, vector<1x128xf32>
    %79 = vector.broadcast %78 : vector<1x128xf32> to vector<64x128xf32>
    %80 = arith.addf %77, %79 : vector<64x128xf32>
    %c6 = arith.constant 6 : index
    %c0_35 = arith.constant 0 : index
    %81 = vector.load %arg3[%c6, %c0_35] : memref<8x256xf32, #tpu.memory_space<vmem>>, vector<1x128xf32>
    %82 = vector.broadcast %81 : vector<1x128xf32> to vector<64x128xf32>
    %83 = arith.mulf %80, %82 : vector<64x128xf32>
    %cst_36 = arith.constant dense<0.000000e+00> : vector<64xf32>
    %84 = vector.multi_reduction <add>, %83, %cst_36 [1] : vector<64x128xf32> to vector<64xf32>
    %85 = vector.shape_cast %84 : vector<64xf32> to vector<64x1xf32>
    %86 = vector.broadcast %1 : f32 to vector<64x1xf32>
    %87 = arith.addf %85, %86 : vector<64x1xf32>
    %88 = vector.shape_cast %87 : vector<64x1xf32> to vector<64x1xf32>
    %89 = vector.broadcast %88 : vector<64x1xf32> to vector<64x8xf32>
    %c0_37 = arith.constant 0 : index
    %c0_38 = arith.constant 0 : index
    %90 = vector.load %arg8[%c0_37, %c0_38] : memref<64x8xf32, #tpu.memory_space<vmem>>, vector<64x8xf32>
    tpu.vector_store %arg8[%c0_37, %c0_38], %89 {strides = array<i32>} : memref<64x8xf32, #tpu.memory_space<vmem>>, vector<64x8xf32>,
    return
  }
  func.func @transform_0(%arg0: i32) -> i32 {
    %c0_i32 = arith.constant 0 : i32
    %c0_i32_0 = arith.constant 0 : i32
    return %c0_i32 : i32
  }
  func.func @transform_1(%arg0: i32) -> (i32, i32) {
    %c0_i32 = arith.constant 0 : i32
    %c0_i32_0 = arith.constant 0 : i32
    return %arg0, %c0_i32 : i32, i32
  }
  func.func @transform_2(%arg0: i32) -> (i32, i32) {
    %c0_i32 = arith.constant 0 : i32
    %c0_i32_0 = arith.constant 0 : i32
    %c0_i32_1 = arith.constant 0 : i32
    return %c0_i32, %c0_i32_0 : i32, i32
  }
  func.func @transform_3(%arg0: i32) -> (i32, i32) {
    %c0_i32 = arith.constant 0 : i32
    %c0_i32_0 = arith.constant 0 : i32
    %c0_i32_1 = arith.constant 0 : i32
    return %c0_i32, %c0_i32_0 : i32, i32
  }
  func.func @transform_4(%arg0: i32) -> (i32, i32) {
    %c0_i32 = arith.constant 0 : i32
    %c0_i32_0 = arith.constant 0 : i32
    %c0_i32_1 = arith.constant 0 : i32
    return %c0_i32, %c0_i32_0 : i32, i32
  }
  func.func @transform_5(%arg0: i32) -> (i32, i32) {
    %c0_i32 = arith.constant 0 : i32
    %c0_i32_0 = arith.constant 0 : i32
    %c0_i32_1 = arith.constant 0 : i32
    return %c0_i32, %c0_i32_0 : i32, i32
  }
  func.func @transform_6(%arg0: i32) -> (i32, i32) {
    %c0_i32 = arith.constant 0 : i32
    %c0_i32_0 = arith.constant 0 : i32
    %c0_i32_1 = arith.constant 0 : i32
    return %c0_i32, %c0_i32_0 : i32, i32
  }
  func.func @transform_7(%arg0: i32) -> (i32, i32) {
    %c0_i32 = arith.constant 0 : i32
    %c0_i32_0 = arith.constant 0 : i32
    return %arg0, %c0_i32 : i32, i32
  }
}

</mosaic_0001>

<llo_original>
// kernel: mlp_attention_forward.1
$region0: #{mlp_attention_forward.1}
  #allocation0 [shape = 'u32[]', space=smem, size = 0x4, offset = 0x4, fixed_abs, tag = 'smem constant byte address 0x4 - core index']
  #allocation1 [shape = 'u32[72,128]{1,0:T(1,128)}', space=vmem, size = 0x9000, scoped, tag = 'internal scratch']
  %s0 = inlined_call_operand.vmem [shape: f32[2], index: 0, kind: input, shape index: {}]
  %s1 = inlined_call_operand.vmem [shape: f32[200,256], index: 1, kind: input, shape index: {}]
  %s2 = inlined_call_operand.vmem [shape: f32[8,256], index: 2, kind: input, shape index: {}]
  %s3 = inlined_call_operand.hbm [shape: f32[256,8], index: 3, kind: input, shape index: {}]
  %s4 = inlined_call_operand.vmem [shape: f32[8,256], index: 4, kind: input, shape index: {}]
  %s5 = inlined_call_operand.vmem [shape: f32[256,256], index: 5, kind: input, shape index: {}]
  %s6 = inlined_call_operand.vmem [shape: f32[256,128], index: 6, kind: input, shape index: {}]
  %s7 = inlined_call_operand.vmem [shape: f32[200,8], index: 7, kind: output, shape index: {}]
  %s8 = sld [smem:[#allocation0]]
  $region117: #{mlp_attention_forward.1} parent=0
    _
  %s10 = ssub.s32 1, %s8
  %s11 = scalar_select 0, %s10, %s8
  $region1: #{mlp_attention_forward.1} parent=0
    #allocation2 [shape = 'u8[512]{0}', space=smem, size = 0x200, scoped, tag = 'input window, operand 0, single buffered']
    #allocation3 [shape = 's32[2]{0}', space=sflag, size = 0x8, scoped, tag = 'scoped memory for mlp_attention_forward.1']
    #allocation4 [shape = 's32[2]{0}', space=sflag, size = 0x8, scoped, tag = 'scoped memory for mlp_attention_forward.1']
    #allocation5 [shape = 'u8[131072]{0}', space=vmem, size = 0x20000, scoped, tag = 'input window, operand 3, single buffered']
    #allocation6 [shape = 'u8[65536]{0}', space=vmem, size = 0x10000, scoped, tag = 'output window, operand 0']
    %12 = vsyncpa [#allocation4], 0
    %13 = vsyncpa [#allocation3], 0
    loop: start=0, step=1, limit=6
    $region2: #{mlp_attention_forward.1} parent=1 // loop_pre_header
      _
    $region3: #{mlp_attention_forward.1} parent=1 // loop_header
      %s15 = sphi 0, %s19
      %p16 = scmp.ge.s32.totalorder %s15, 6
      %s23 = sphi 0, %s23
      %s25 = sphi 0, %s23
      %s26 = sphi 0, %s25
      %s40 = sphi 0, %s26
      %s46 = sphi 0, %s48
      %s49 = sphi 0, %s46
      %s50 = sphi 0, %s49
      %s66 = sphi 0, %s50
      %s70 = sphi 0, %s70
      %s72 = sphi 0, %s70
      %s73 = sphi 0, %s72
      %s87 = sphi 0, %s73
      %s91 = sphi 0, %s91
      %s93 = sphi 0, %s91
      %s94 = sphi 0, %s93
      %s108 = sphi 0, %s94
      %s112 = sphi 0, %s112
      %s114 = sphi 0, %s112
      %s115 = sphi 0, %s114
      %s129 = sphi 0, %s115
      %s133 = sphi 0, %s133
      %s135 = sphi 0, %s133
      %s136 = sphi 0, %s135
      %s150 = sphi 0, %s136
      %s154 = sphi 0, %s154
      %s156 = sphi 0, %s154
      %s157 = sphi 0, %s156
      %s171 = sphi 0, %s157
      %s177 = sphi 0, %s179
      %s180 = sphi 0, %s177
      %s181 = sphi 0, %s180
      %s197 = sphi 0, %s181
    $region4: #{mlp_attention_forward.1} parent=1 // loop_header_branch
      %18 = sbr.rel (%p16) target = $region8
    $region5: #{mlp_attention_forward.1} parent=1 // loop_body
      %s20 = ssub.s32 %s15, 1
      %s21 = ssub.s32 %s15, 2
      %s22 = sadd.s32 %s15, 1
      %s24 = sadd.s32 %s23, 1
      %p27 = scmp.eq.s32.totalorder %s15, 3
      %p28 = scmp.ne.s32.totalorder %s23, %s25
      %p29 = scmp.eq.s32.totalorder %s15, 0
      %p30 = por %p28, %p29
      %p31 = scmp.ne.s32.totalorder %s23, %s25
      %p32 = scmp.eq.s32.totalorder %s20, 3
      %p33 = por %p31, %p32
      %p34 = scmp.ne.s32.totalorder %s25, %s26
      %p35 = scmp.eq.s32.totalorder %s20, 0
      %p36 = por %p34, %p35
      %p37 = scmp.ne.s32.totalorder %s25, %s26
      %p38 = scmp.eq.s32.totalorder %s21, 3
      %p39 = por %p37, %p38
      %p41 = scmp.ne.s32.totalorder %s26, %s40
      %p42 = scmp.eq.s32.totalorder %s21, 0
      %p43 = por %p41, %p42
      %s44 = ssub.s32 %s15, %s22
      %p45 = scmp.eq.s32.totalorder %s44, 0
      %s47 = sadd.s32 %s46, 1
      %s48 = scalar_select %p45, %s46, %s47
      %p51 = pneg %p45
      %p52 = scmp.eq.s32.totalorder %s15, 3
      %p53 = por %p51, %p52
      %p54 = scmp.ne.s32.totalorder %s46, %s49
      %p55 = scmp.eq.s32.totalorder %s15, 0
      %p56 = por %p54, %p55
      %p57 = scmp.ne.s32.totalorder %s46, %s49
      %p58 = scmp.eq.s32.totalorder %s20, 3
      %p59 = por %p57, %p58
      %p60 = scmp.ne.s32.totalorder %s49, %s50
      %p61 = scmp.eq.s32.totalorder %s20, 0
      %p62 = por %p60, %p61
      %p63 = scmp.ne.s32.totalorder %s49, %s50
      %p64 = scmp.eq.s32.totalorder %s21, 3
      %p65 = por %p63, %p64
      %p67 = scmp.ne.s32.totalorder %s50, %s66
      %p68 = scmp.eq.s32.totalorder %s21, 0
      %p69 = por %p67, %p68
      %s71 = sadd.s32 %s70, 1
      %p74 = scmp.eq.s32.totalorder %s15, 3
      %p75 = scmp.ne.s32.totalorder %s70, %s72
      %p76 = scmp.eq.s32.totalorder %s15, 0
      %p77 = por %p75, %p76
      %p78 = scmp.ne.s32.totalorder %s70, %s72
      %p79 = scmp.eq.s32.totalorder %s20, 3
      %p80 = por %p78, %p79
      %p81 = scmp.ne.s32.totalorder %s72, %s73
      %p82 = scmp.eq.s32.totalorder %s20, 0
      %p83 = por %p81, %p82
      %p84 = scmp.ne.s32.totalorder %s72, %s73
      %p85 = scmp.eq.s32.totalorder %s21, 3
      %p86 = por %p84, %p85
      %p88 = scmp.ne.s32.totalorder %s73, %s87
      %p89 = scmp.eq.s32.totalorder %s21, 0
      %p90 = por %p88, %p89
      %s92 = sadd.s32 %s91, 1
      %p95 = scmp.eq.s32.totalorder %s15, 3
      %p96 = scmp.ne.s32.totalorder %s91, %s93
      %p97 = scmp.eq.s32.totalorder %s15, 0
      %p98 = por %p96, %p97
      %p99 = scmp.ne.s32.totalorder %s91, %s93
      %p100 = scmp.eq.s32.totalorder %s20, 3
      %p101 = por %p99, %p100
      %p102 = scmp.ne.s32.totalorder %s93, %s94
      %p103 = scmp.eq.s32.totalorder %s20, 0
      %p104 = por %p102, %p103
      %p105 = scmp.ne.s32.totalorder %s93, %s94
      %p106 = scmp.eq.s32.totalorder %s21, 3
      %p107 = por %p105, %p106
      %p109 = scmp.ne.s32.totalorder %s94, %s108
      %p110 = scmp.eq.s32.totalorder %s21, 0
      %p111 = por %p109, %p110
      %s113 = sadd.s32 %s112, 1
      %p116 = scmp.eq.s32.totalorder %s15, 3
      %p117 = scmp.ne.s32.totalorder %s112, %s114
      %p118 = scmp.eq.s32.totalorder %s15, 0
      %p119 = por %p117, %p118
      %p120 = scmp.ne.s32.totalorder %s112, %s114
      %p121 = scmp.eq.s32.totalorder %s20, 3
      %p122 = por %p120, %p121
      %p123 = scmp.ne.s32.totalorder %s114, %s115
      %p124 = scmp.eq.s32.totalorder %s20, 0
      %p125 = por %p123, %p124
      %p126 = scmp.ne.s32.totalorder %s114, %s115
      %p127 = scmp.eq.s32.totalorder %s21, 3
      %p128 = por %p126, %p127
      %p130 = scmp.ne.s32.totalorder %s115, %s129
      %p131 = scmp.eq.s32.totalorder %s21, 0
      %p132 = por %p130, %p131
      %s134 = sadd.s32 %s133, 1
      %p137 = scmp.eq.s32.totalorder %s15, 3
      %p138 = scmp.ne.s32.totalorder %s133, %s135
      %p139 = scmp.eq.s32.totalorder %s15, 0
      %p140 = por %p138, %p139
      %p141 = scmp.ne.s32.totalorder %s133, %s135
      %p142 = scmp.eq.s32.totalorder %s20, 3
      %p143 = por %p141, %p142
      %p144 = scmp.ne.s32.totalorder %s135, %s136
      %p145 = scmp.eq.s32.totalorder %s20, 0
      %p146 = por %p144, %p145
      %p147 = scmp.ne.s32.totalorder %s135, %s136
      %p148 = scmp.eq.s32.totalorder %s21, 3
      %p149 = por %p147, %p148
      %p151 = scmp.ne.s32.totalorder %s136, %s150
      %p152 = scmp.eq.s32.totalorder %s21, 0
      %p153 = por %p151, %p152
      %s155 = sadd.s32 %s154, 1
      %p158 = scmp.eq.s32.totalorder %s15, 3
      %p159 = scmp.ne.s32.totalorder %s154, %s156
      %p160 = scmp.eq.s32.totalorder %s15, 0
      %p161 = por %p159, %p160
      %p162 = scmp.ne.s32.totalorder %s154, %s156
      %p163 = scmp.eq.s32.totalorder %s20, 3
      %p164 = por %p162, %p163
      %p165 = scmp.ne.s32.totalorder %s156, %s157
      %p166 = scmp.eq.s32.totalorder %s20, 0
      %p167 = por %p165, %p166
      %p168 = scmp.ne.s32.totalorder %s156, %s157
      %p169 = scmp.eq.s32.totalorder %s21, 3
      %p170 = por %p168, %p169
      %p172 = scmp.ne.s32.totalorder %s157, %s171
      %p173 = scmp.eq.s32.totalorder %s21, 0
      %p174 = por %p172, %p173
      %s175 = ssub.s32 %s15, %s22
      %p176 = scmp.eq.s32.totalorder %s175, 0
      %s178 = sadd.s32 %s177, 1
      %s179 = scalar_select %p176, %s177, %s178
      %p182 = pneg %p176
      %p183 = scmp.eq.s32.totalorder %s15, 3
      %p184 = por %p182, %p183
      %p185 = scmp.ne.s32.totalorder %s177, %s180
      %p186 = scmp.eq.s32.totalorder %s15, 0
      %p187 = por %p185, %p186
      %p188 = scmp.ne.s32.totalorder %s177, %s180
      %p189 = scmp.eq.s32.totalorder %s20, 3
      %p190 = por %p188, %p189
      %p191 = scmp.ne.s32.totalorder %s180, %s181
      %p192 = scmp.eq.s32.totalorder %s20, 0
      %p193 = por %p191, %p192
      %p194 = scmp.ne.s32.totalorder %s180, %s181
      %p195 = scmp.eq.s32.totalorder %s21, 3
      %p196 = por %p194, %p195
      %p198 = scmp.ne.s32.totalorder %s181, %s197
      %p199 = scmp.eq.s32.totalorder %s21, 0
      %p200 = por %p198, %p199
      %p201 = scmp.le.s32.totalorder 1, %s15
      %p202 = scmp.lt.s32.totalorder %s15, 5
      %p203 = pnand %p201, %p202
      %p204 = pneg %p203
      // Predicated region
      $region9: #{mlp_attention_forward.1} parent=5 // pred_check
        _
      $region10: #{mlp_attention_forward.1} parent=5 // pred_check_branch
        %206 = sbr.rel (%p203) target = $region12
      $region11: #{mlp_attention_forward.1} parent=5 // pred_region
        %s207 = ssub.s32 %s15, 1
        // Predicated region
        $region13: #{mlp_attention_forward.1} parent=11 // pred_check
          %p208 = pneg %p36
        $region14: #{mlp_attention_forward.1} parent=11 // pred_check_branch
          %210 = sbr.rel (%p208) target = $region16
        $region15: #{mlp_attention_forward.1} parent=11 // pred_region
          %212 = vsyncadd [#allocation4], 0
          %s214 = sshll.u32 %s0, 4
          %s215 = int_to_ptr.vmem [resolvable:$true] %s214
          %217 = dma.vmem_to_smem %s215, 16, [#allocation2], [#allocation4]
        $region16: #{mlp_attention_forward.1} parent=11 // pred_fallthru
          _
        // Predicated region
        $region17: #{mlp_attention_forward.1} parent=11 // pred_check
          %p218 = pneg %p83
        $region18: #{mlp_attention_forward.1} parent=11 // pred_check_branch
          %220 = sbr.rel (%p218) target = $region20
        $region19: #{mlp_attention_forward.1} parent=11 // pred_region
          _
        $region20: #{mlp_attention_forward.1} parent=11 // pred_fallthru
          _
        // Predicated region
        $region21: #{mlp_attention_forward.1} parent=11 // pred_check
          %p221 = pneg %p104
        $region22: #{mlp_attention_forward.1} parent=11 // pred_check_branch
          %223 = sbr.rel (%p221) target = $region24
        $region23: #{mlp_attention_forward.1} parent=11 // pred_region
          %225 = vsyncadd [#allocation3], 0
          %s226 = sshll.u32 %s3, 4
          %s227 = int_to_ptr.hbm [resolvable:$true] %s226
          %s228 = sshll.u32 [#allocation5], 4
          %s229 = int_to_ptr.vmem [resolvable:$true] %s228
          %234 = dma.hbm_to_vmem [thread:$0]  %s227, 4096, %s229, [#allocation3], 128, 128, 8
        $region24: #{mlp_attention_forward.1} parent=11 // pred_fallthru
          _
        // Predicated region
        $region25: #{mlp_attention_forward.1} parent=11 // pred_check
          %p235 = pneg %p125
        $region26: #{mlp_attention_forward.1} parent=11 // pred_check_branch
          %237 = sbr.rel (%p235) target = $region28
        $region27: #{mlp_attention_forward.1} parent=11 // pred_region
          _
        $region28: #{mlp_attention_forward.1} parent=11 // pred_fallthru
          _
        // Predicated region
        $region29: #{mlp_attention_forward.1} parent=11 // pred_check
          %p238 = pneg %p146
        $region30: #{mlp_attention_forward.1} parent=11 // pred_check_branch
          %240 = sbr.rel (%p238) target = $region32
        $region31: #{mlp_attention_forward.1} parent=11 // pred_region
          _
        $region32: #{mlp_attention_forward.1} parent=11 // pred_fallthru
          _
        // Predicated region
        $region33: #{mlp_attention_forward.1} parent=11 // pred_check
          %p241 = pneg %p167
        $region34: #{mlp_attention_forward.1} parent=11 // pred_check_branch
          %243 = sbr.rel (%p241) target = $region36
        $region35: #{mlp_attention_forward.1} parent=11 // pred_region
          _
        $region36: #{mlp_attention_forward.1} parent=11 // pred_fallthru
          _
      $region12: #{mlp_attention_forward.1} parent=5 // pred_fallthru
        _
      %p244 = scmp.lt.s32.totalorder %s15, 4
      // Predicated region
      $region37: #{mlp_attention_forward.1} parent=5 // pred_check
        %p245 = pneg %p244
      $region38: #{mlp_attention_forward.1} parent=5 // pred_check_branch
        %247 = sbr.rel (%p245) target = $region40
      $region39: #{mlp_attention_forward.1} parent=5 // pred_region
        // Predicated region
        $region41: #{mlp_attention_forward.1} parent=39 // pred_check
          %p248 = pneg %p56
        $region42: #{mlp_attention_forward.1} parent=39 // pred_check_branch
          %250 = sbr.rel (%p248) target = $region44
        $region43: #{mlp_attention_forward.1} parent=39 // pred_region
          %s251 = smul.u32 8, %s15
          %s252 = ssub.s32 25, %s251
          %p253 = scmp.lt.s32.totalorder %s252, 8
          %s254 = scalar_select %p253, %s252, 8
          %s255 = smul.u32 8, %s254
          %s256 = smul.u32 %s255, 2
          %p257 = scmp.lt.s32.totalorder %s251, 24
          %s258 = scalar_select %p257, %s251, 24
          %s259 = smul.addr %s258, 2
          %s260 = smul.addr %s259, 8
          %s261 = scalar_lea.vmem %s1, %s260
          %s262 = smul.u32 8, %s15
          %s263 = ssub.s32 25, %s262
          %p264 = scmp.lt.s32.totalorder %s263, 8
          %s265 = scalar_select %p264, %s263, 8
          %s266 = smul.u32 8, %s265
          %s267 = smul.u32 %s266, 2
        $region44: #{mlp_attention_forward.1} parent=39 // pred_fallthru
          _
      $region40: #{mlp_attention_forward.1} parent=5 // pred_fallthru
        _
      %p268 = scmp.le.s32.totalorder 1, %s15
      %p269 = scmp.lt.s32.totalorder %s15, 5
      %p270 = pnand %p268, %p269
      %p271 = pneg %p270
      // Predicated region
      $region45: #{mlp_attention_forward.1} parent=5 // pred_check
        _
      $region46: #{mlp_attention_forward.1} parent=5 // pred_check_branch
        %273 = sbr.rel (%p270) target = $region48
      $region47: #{mlp_attention_forward.1} parent=5 // pred_region
        %s274 = ssub.s32 %s15, 1
        // Predicated region
        $region49: #{mlp_attention_forward.1} parent=47 // pred_check
          %p275 = pneg %p36
        $region50: #{mlp_attention_forward.1} parent=47 // pred_check_branch
          %277 = sbr.rel (%p275) target = $region52
        $region51: #{mlp_attention_forward.1} parent=47 // pred_region
          %279 = dma.done [#allocation4], 16
        $region52: #{mlp_attention_forward.1} parent=47 // pred_fallthru
          _
        // Predicated region
        $region53: #{mlp_attention_forward.1} parent=47 // pred_check
          %p280 = pneg %p104
        $region54: #{mlp_attention_forward.1} parent=47 // pred_check_branch
          %282 = sbr.rel (%p280) target = $region56
        $region55: #{mlp_attention_forward.1} parent=47 // pred_region
          %284 = dma.done [#allocation3], 4096
        $region56: #{mlp_attention_forward.1} parent=47 // pred_fallthru
          _
        %285 = sfence
        %p286 = pneg %p36
        %p287 = pneg %p33
        %s288 = smul.u32 8, %s20
        %s289 = ssub.s32 25, %s288
        %p290 = scmp.lt.s32.totalorder %s289, 8
        %s291 = scalar_select %p290, %s289, 8
        %s292 = smul.u32 8, %s291
        %s293 = smul.u32 %s292, 2
        %p294 = scmp.lt.s32.totalorder %s288, 24
        %s295 = scalar_select %p294, %s288, 24
        %s296 = smul.addr %s295, 2
        %s297 = smul.addr %s296, 8
        %s298 = scalar_lea.vmem %s1, %s297
        %p299 = pneg %p62
        %p300 = pneg %p59
        %p301 = pneg %p83
        %p302 = pneg %p80
        %p303 = pneg %p104
        %p304 = pneg %p101
        %p305 = pneg %p125
        %p306 = pneg %p122
        %p307 = pneg %p146
        %p308 = pneg %p143
        %p309 = pneg %p167
        %p310 = pneg %p164
        %p311 = pneg %p193
        %p312 = pneg %p190
        %s313 = sand.u32 %s180, 1
        %s314 = sand.u32 %s180, 1
        %s315 = smul.addr %s314, 64
        %s316 = scalar_lea.vmem [#allocation6], %s315
        %s317 = smul.u32 8, %s20
        %s318 = ssub.s32 25, %s317
        %p319 = scmp.lt.s32.totalorder %s318, 8
        %s320 = scalar_select %p319, %s318, 8
        %s321 = smul.u32 8, %s320
        %s322 = smul.u32 %s321, 2
        %p323 = scmp.lt.s32.totalorder %s317, 24
        %s324 = scalar_select %p323, %s317, 24
        %s325 = smul.addr %s324, 2
        %s326 = smul.addr %s325, 8
        %s327 = scalar_lea.vmem %s1, %s326
        %s328 = smul.u32 8, %s20
        %s329 = ssub.s32 25, %s328
        %p330 = scmp.lt.s32.totalorder %s329, 8
        %s331 = scalar_select %p330, %s329, 8
        %s332 = smul.u32 8, %s331
        %s333 = smul.u32 %s332, 2
        %s334 = smul.u32 8, %s20
        %s335 = ssub.s32 25, %s334
        %p336 = scmp.lt.s32.totalorder %s335, 8
        %s337 = scalar_select %p336, %s335, 8
        %s338 = smul.u32 8, %s337
        %s339 = sld [smem:[#allocation2]]
        %s340 = sld [smem:[#allocation2 + $0x1]]
        %v341 = vld [vmem:[%s327] sm:$0xff]
        %v342 = vld [vmem:[%s327 + $0x8] sm:$0xff]
        %v343 = vld [vmem:[%s327 + $0x10] sm:$0xff]
        %v344 = vld [vmem:[%s327 + $0x18] sm:$0xff]
        %v345 = vld [vmem:[%s327 + $0x20] sm:$0xff]
        %v346 = vld [vmem:[%s327 + $0x28] sm:$0xff]
        %v347 = vld [vmem:[%s327 + $0x30] sm:$0xff]
        %v348 = vld [vmem:[%s327 + $0x38] sm:$0xff]
        %v349 = vld [vmem:[%s327 + $0x40] sm:$0xff]
        %v350 = vld [vmem:[%s327 + $0x48] sm:$0xff]
        %v351 = vld [vmem:[%s327 + $0x50] sm:$0xff]
        %v352 = vld [vmem:[%s327 + $0x58] sm:$0xff]
        %v353 = vld [vmem:[%s327 + $0x60] sm:$0xff]
        %v354 = vld [vmem:[%s327 + $0x68] sm:$0xff]
        %v355 = vld [vmem:[%s327 + $0x70] sm:$0xff]
        %v356 = vld [vmem:[%s327 + $0x78] sm:$0xff]
        %v357 = vld [vmem:[#allocation5] sm:$0xff]
        %v358 = vld [vmem:[#allocation5 + $0x8] sm:$0xff]
        %v359 = vld [vmem:[#allocation5 + $0x10] sm:$0xff]
        %v360 = vld [vmem:[#allocation5 + $0x18] sm:$0xff]
        %v361 = vld [vmem:[#allocation5 + $0x20] sm:$0xff]
        %v362 = vld [vmem:[#allocation5 + $0x28] sm:$0xff]
        %v363 = vld [vmem:[#allocation5 + $0x30] sm:$0xff]
        %v364 = vld [vmem:[#allocation5 + $0x38] sm:$0xff]
        %v365 = vld [vmem:[#allocation5 + $0x40] sm:$0xff]
        %v366 = vld [vmem:[#allocation5 + $0x48] sm:$0xff]
        %v367 = vld [vmem:[#allocation5 + $0x50] sm:$0xff]
        %v368 = vld [vmem:[#allocation5 + $0x58] sm:$0xff]
        %v369 = vld [vmem:[#allocation5 + $0x60] sm:$0xff]
        %v370 = vld [vmem:[#allocation5 + $0x68] sm:$0xff]
        %v371 = vld [vmem:[#allocation5 + $0x70] sm:$0xff]
        %v372 = vld [vmem:[#allocation5 + $0x78] sm:$0xff]
        %v373 = vld [vmem:[#allocation5 + $0x80] sm:$0xff]
        %v374 = vld [vmem:[#allocation5 + $0x88] sm:$0xff]
        %v375 = vld [vmem:[#allocation5 + $0x90] sm:$0xff]
        %v376 = vld [vmem:[#allocation5 + $0x98] sm:$0xff]
        %v377 = vld [vmem:[#allocation5 + $0xa0] sm:$0xff]
        %v378 = vld [vmem:[#allocation5 + $0xa8] sm:$0xff]
        %v379 = vld [vmem:[#allocation5 + $0xb0] sm:$0xff]
        %v380 = vld [vmem:[#allocation5 + $0xb8] sm:$0xff]
        %v381 = vld [vmem:[#allocation5 + $0xc0] sm:$0xff]
        %v382 = vld [vmem:[#allocation5 + $0xc8] sm:$0xff]
        %v383 = vld [vmem:[#allocation5 + $0xd0] sm:$0xff]
        %v384 = vld [vmem:[#allocation5 + $0xd8] sm:$0xff]
        %v385 = vld [vmem:[#allocation5 + $0xe0] sm:$0xff]
        %v386 = vld [vmem:[#allocation5 + $0xe8] sm:$0xff]
        %v387 = vld [vmem:[#allocation5 + $0xf0] sm:$0xff]
        %v388 = vld [vmem:[#allocation5 + $0xf8] sm:$0xff]
        %v389 = vstv %s339
        %390 = vmatpush.msra.mxu0 %v372
        %391 = vmatpush.msra.mxu0 %v371
        %392 = vmatpush.msra.mxu0 %v370
        %393 = vmatpush.msra.mxu0 %v369
        %394 = vmatpush.msra.mxu0 %v368
        %395 = vmatpush.msra.mxu0 %v367
        %396 = vmatpush.msra.mxu0 %v366
        %397 = vmatpush.msra.mxu0 %v365
        %398 = vmatpush.msra.mxu0 %v364
        %399 = vmatpush.msra.mxu0 %v363
        %400 = vmatpush.msra.mxu0 %v362
        %401 = vmatpush.msra.mxu0 %v361
        %402 = vmatpush.msra.mxu0 %v360
        %403 = vmatpush.msra.mxu0 %v359
        %404 = vmatpush.msra.mxu0 %v358
        %405 = vmatpush.msra.mxu0 %v357
        %406 = vmatmul.f32.gmra.mxu0 %v341
        %v407 = vpop.f32.mrf.mxu0
        %v408 = vadd.f32 %v389, %v407
        %409 = vmatmul.f32.gmra.mxu0 %v343
        %v410 = vpop.f32.mrf.mxu0
        %v411 = vadd.f32 %v389, %v410
        %412 = vmatmul.f32.gmra.mxu0 %v345
        %v413 = vpop.f32.mrf.mxu0
        %v414 = vadd.f32 %v389, %v413
        %415 = vmatmul.f32.gmra.mxu0 %v347
        %v416 = vpop.f32.mrf.mxu0
        %v417 = vadd.f32 %v389, %v416
        %418 = vmatmul.f32.gmra.mxu0 %v349
        %v419 = vpop.f32.mrf.mxu0
        %v420 = vadd.f32 %v389, %v419
        %421 = vmatmul.f32.gmra.mxu0 %v351
        %v422 = vpop.f32.mrf.mxu0
        %v423 = vadd.f32 %v389, %v422
        %424 = vmatmul.f32.gmra.mxu0 %v353
        %v425 = vpop.f32.mrf.mxu0
        %v426 = vadd.f32 %v389, %v425
        %427 = vmatmul.f32.gmra.mxu0 %v355
        %v428 = vpop.f32.mrf.mxu0
        %v429 = vadd.f32 %v389, %v428
        %430 = vdwg.mxu0
        %431 = vmatpush.msra.mxu0 %v388
        %432 = vmatpush.msra.mxu0 %v387
        %433 = vmatpush.msra.mxu0 %v386
        %434 = vmatpush.msra.mxu0 %v385
        %435 = vmatpush.msra.mxu0 %v384
        %436 = vmatpush.msra.mxu0 %v383
        %437 = vmatpush.msra.mxu0 %v382
        %438 = vmatpush.msra.mxu0 %v381
        %439 = vmatpush.msra.mxu0 %v380
        %440 = vmatpush.msra.mxu0 %v379
        %441 = vmatpush.msra.mxu0 %v378
        %442 = vmatpush.msra.mxu0 %v377
        %443 = vmatpush.msra.mxu0 %v376
        %444 = vmatpush.msra.mxu0 %v375
        %445 = vmatpush.msra.mxu0 %v374
        %446 = vmatpush.msra.mxu0 %v373
        %447 = vmatmul.f32.gmra.mxu0 %v342
        %v448 = vpop.f32.mrf.mxu0
        %v449 = vadd.f32 %v408, %v448
        %450 = vmatmul.f32.gmra.mxu0 %v344
        %v451 = vpop.f32.mrf.mxu0
        %v452 = vadd.f32 %v411, %v451
        %453 = vmatmul.f32.gmra.mxu0 %v346
        %v454 = vpop.f32.mrf.mxu0
        %v455 = vadd.f32 %v414, %v454
        %456 = vmatmul.f32.gmra.mxu0 %v348
        %v457 = vpop.f32.mrf.mxu0
        %v458 = vadd.f32 %v417, %v457
        %459 = vmatmul.f32.gmra.mxu0 %v350
        %v460 = vpop.f32.mrf.mxu0
        %v461 = vadd.f32 %v420, %v460
        %462 = vmatmul.f32.gmra.mxu0 %v352
        %v463 = vpop.f32.mrf.mxu0
        %v464 = vadd.f32 %v423, %v463
        %465 = vmatmul.f32.gmra.mxu0 %v354
        %v466 = vpop.f32.mrf.mxu0
        %v467 = vadd.f32 %v426, %v466
        %468 = vmatmul.f32.gmra.mxu0 %v356
        %v469 = vpop.f32.mrf.mxu0
        %v470 = vadd.f32 %v429, %v469
        %471 = vdwg.mxu0
        %vm472 = vcmask 64512
        %v473 = vsel %vm472, %v449, -inf
        %474 = vmax.xlane.f32.xlu0 %v473
        %v475 = vpop.xlane.xlu0 %474
        %v476 = vsel %vm472, %v452, -inf
        %477 = vmax.xlane.f32.xlu0 %v476
        %v478 = vpop.xlane.xlu0 %477
        %v479 = vsel %vm472, %v455, -inf
        %480 = vmax.xlane.f32.xlu0 %v479
        %v481 = vpop.xlane.xlu0 %480
        %v482 = vsel %vm472, %v458, -inf
        %483 = vmax.xlane.f32.xlu0 %v482
        %v484 = vpop.xlane.xlu0 %483
        %v485 = vsel %vm472, %v461, -inf
        %486 = vmax.xlane.f32.xlu0 %v485
        %v487 = vpop.xlane.xlu0 %486
        %v488 = vsel %vm472, %v464, -inf
        %489 = vmax.xlane.f32.xlu0 %v488
        %v490 = vpop.xlane.xlu0 %489
        %v491 = vsel %vm472, %v467, -inf
        %492 = vmax.xlane.f32.xlu0 %v491
        %v493 = vpop.xlane.xlu0 %492
        %v494 = vsel %vm472, %v470, -inf
        %495 = vmax.xlane.f32.xlu0 %v494
        %v496 = vpop.xlane.xlu0 %495
        %v497 = vsub.f32 %v449, %v475
        %v498 = vsub.f32 %v452, %v478
        %v499 = vsub.f32 %v455, %v481
        %v500 = vsub.f32 %v458, %v484
        %v501 = vsub.f32 %v461, %v487
        %v502 = vsub.f32 %v464, %v490
        %v503 = vsub.f32 %v467, %v493
        %v504 = vsub.f32 %v470, %v496
        %v505 = vmul.f32 %v497, 1.442695
        %v506 = vpow.pop %v505
        %v507 = vmul.f32 %v498, 1.442695
        %v508 = vpow.pop %v507
        %v509 = vmul.f32 %v499, 1.442695
        %v510 = vpow.pop %v509
        %v511 = vmul.f32 %v500, 1.442695
        %v512 = vpow.pop %v511
        %v513 = vmul.f32 %v501, 1.442695
        %v514 = vpow.pop %v513
        %v515 = vmul.f32 %v502, 1.442695
        %v516 = vpow.pop %v515
        %v517 = vmul.f32 %v503, 1.442695
        %v518 = vpow.pop %v517
        %v519 = vmul.f32 %v504, 1.442695
        %v520 = vpow.pop %v519
        %v521 = vsel %vm472, %v506, 0.0
        %522 = vadd.xlane.f32.xlu0 %v521
        %v523 = vpop.xlane.xlu0 %522
        %v524 = vsel %vm472, %v508, 0.0
        %525 = vadd.xlane.f32.xlu0 %v524
        %v526 = vpop.xlane.xlu0 %525
        %v527 = vsel %vm472, %v510, 0.0
        %528 = vadd.xlane.f32.xlu0 %v527
        %v529 = vpop.xlane.xlu0 %528
        %v530 = vsel %vm472, %v512, 0.0
        %531 = vadd.xlane.f32.xlu0 %v530
        %v532 = vpop.xlane.xlu0 %531
        %v533 = vsel %vm472, %v514, 0.0
        %534 = vadd.xlane.f32.xlu0 %v533
        %v535 = vpop.xlane.xlu0 %534
        %v536 = vsel %vm472, %v516, 0.0
        %537 = vadd.xlane.f32.xlu0 %v536
        %v538 = vpop.xlane.xlu0 %537
        %v539 = vsel %vm472, %v518, 0.0
        %540 = vadd.xlane.f32.xlu0 %v539
        %v541 = vpop.xlane.xlu0 %540
        %v542 = vsel %vm472, %v520, 0.0
        %543 = vadd.xlane.f32.xlu0 %v542
        %v544 = vpop.xlane.xlu0 %543
        %v545 = vrcp.pop %v523
        %v546 = vmul.f32 %v523, %v545
        %v547 = vsub.f32 1.0, %v546
        %v548 = vmul.f32 %v545, %v547
        %v549 = vadd.f32 %v545, %v548
        %vm550 = vweird.f32 %v523
        %vm551 = vweird.f32 %v545
        %vm552 = vmor %vm550, %vm551
        %v553 = vsel %vm552, %v545, %v549
        %v554 = vand.u32 2147483647, %v523
        %vm555 = vcmp.eq.f32.partialorder %v554, 8.507059e+37
        %v556 = vand.u32 %v523, 2147483648
        %v557 = vor.u32 1.1754944e-38, %v556
        %v558 = vsel %vm555, %v557, %v553
        %v559 = vmul.f32 %v506, %v558
        %v560 = vrcp.pop %v526
        %v561 = vmul.f32 %v526, %v560
        %v562 = vsub.f32 1.0, %v561
        %v563 = vmul.f32 %v560, %v562
        %v564 = vadd.f32 %v560, %v563
        %vm565 = vweird.f32 %v526
        %vm566 = vweird.f32 %v560
        %vm567 = vmor %vm565, %vm566
        %v568 = vsel %vm567, %v560, %v564
        %v569 = vand.u32 2147483647, %v526
        %vm570 = vcmp.eq.f32.partialorder %v569, 8.507059e+37
        %v571 = vand.u32 %v526, 2147483648
        %v572 = vor.u32 1.1754944e-38, %v571
        %v573 = vsel %vm570, %v572, %v568
        %v574 = vmul.f32 %v508, %v573
        %v575 = vrcp.pop %v529
        %v576 = vmul.f32 %v529, %v575
        %v577 = vsub.f32 1.0, %v576
        %v578 = vmul.f32 %v575, %v577
        %v579 = vadd.f32 %v575, %v578
        %vm580 = vweird.f32 %v529
        %vm581 = vweird.f32 %v575
        %vm582 = vmor %vm580, %vm581
        %v583 = vsel %vm582, %v575, %v579
        %v584 = vand.u32 2147483647, %v529
        %vm585 = vcmp.eq.f32.partialorder %v584, 8.507059e+37
        %v586 = vand.u32 %v529, 2147483648
        %v587 = vor.u32 1.1754944e-38, %v586
        %v588 = vsel %vm585, %v587, %v583
        %v589 = vmul.f32 %v510, %v588
        %v590 = vrcp.pop %v532
        %v591 = vmul.f32 %v532, %v590
        %v592 = vsub.f32 1.0, %v591
        %v593 = vmul.f32 %v590, %v592
        %v594 = vadd.f32 %v590, %v593
        %vm595 = vweird.f32 %v532
        %vm596 = vweird.f32 %v590
        %vm597 = vmor %vm595, %vm596
        %v598 = vsel %vm597, %v590, %v594
        %v599 = vand.u32 2147483647, %v532
        %vm600 = vcmp.eq.f32.partialorder %v599, 8.507059e+37
        %v601 = vand.u32 %v532, 2147483648
        %v602 = vor.u32 1.1754944e-38, %v601
        %v603 = vsel %vm600, %v602, %v598
        %v604 = vmul.f32 %v512, %v603
        %v605 = vrcp.pop %v535
        %v606 = vmul.f32 %v535, %v605
        %v607 = vsub.f32 1.0, %v606
        %v608 = vmul.f32 %v605, %v607
        %v609 = vadd.f32 %v605, %v608
        %vm610 = vweird.f32 %v535
        %vm611 = vweird.f32 %v605
        %vm612 = vmor %vm610, %vm611
        %v613 = vsel %vm612, %v605, %v609
        %v614 = vand.u32 2147483647, %v535
        %vm615 = vcmp.eq.f32.partialorder %v614, 8.507059e+37
        %v616 = vand.u32 %v535, 2147483648
        %v617 = vor.u32 1.1754944e-38, %v616
        %v618 = vsel %vm615, %v617, %v613
        %v619 = vmul.f32 %v514, %v618
        %v620 = vrcp.pop %v538
        %v621 = vmul.f32 %v538, %v620
        %v622 = vsub.f32 1.0, %v621
        %v623 = vmul.f32 %v620, %v622
        %v624 = vadd.f32 %v620, %v623
        %vm625 = vweird.f32 %v538
        %vm626 = vweird.f32 %v620
        %vm627 = vmor %vm625, %vm626
        %v628 = vsel %vm627, %v620, %v624
        %v629 = vand.u32 2147483647, %v538
        %vm630 = vcmp.eq.f32.partialorder %v629, 8.507059e+37
        %v631 = vand.u32 %v538, 2147483648
        %v632 = vor.u32 1.1754944e-38, %v631
        %v633 = vsel %vm630, %v632, %v628
        %v634 = vmul.f32 %v516, %v633
        %v635 = vrcp.pop %v541
        %v636 = vmul.f32 %v541, %v635
        %v637 = vsub.f32 1.0, %v636
        %v638 = vmul.f32 %v635, %v637
        %v639 = vadd.f32 %v635, %v638
        %vm640 = vweird.f32 %v541
        %vm641 = vweird.f32 %v635
        %vm642 = vmor %vm640, %vm641
        %v643 = vsel %vm642, %v635, %v639
        %v644 = vand.u32 2147483647, %v541
        %vm645 = vcmp.eq.f32.partialorder %v644, 8.507059e+37
        %v646 = vand.u32 %v541, 2147483648
        %v647 = vor.u32 1.1754944e-38, %v646
        %v648 = vsel %vm645, %v647, %v643
        %v649 = vmul.f32 %v518, %v648
        %v650 = vrcp.pop %v544
        %v651 = vmul.f32 %v544, %v650
        %v652 = vsub.f32 1.0, %v651
        %v653 = vmul.f32 %v650, %v652
        %v654 = vadd.f32 %v650, %v653
        %vm655 = vweird.f32 %v544
        %vm656 = vweird.f32 %v650
        %vm657 = vmor %vm655, %vm656
        %v658 = vsel %vm657, %v650, %v654
        %v659 = vand.u32 2147483647, %v544
        %vm660 = vcmp.eq.f32.partialorder %v659, 8.507059e+37
        %v661 = vand.u32 %v544, 2147483648
        %v662 = vor.u32 1.1754944e-38, %v661
        %v663 = vsel %vm660, %v662, %v658
        %v664 = vmul.f32 %v520, %v663
        %v665 = vld [vmem:[%s4] sm:$0xff]
        %v666 = vld [vmem:[%s4 + $0x8] sm:$0xff]
        %v668 = vsel %vm472, %v559, 0
        %v671 = vsel %vm472, %v574, 0
        %v674 = vsel %vm472, %v589, 0
        %v677 = vsel %vm472, %v604, 0
        %v680 = vsel %vm472, %v619, 0
        %v683 = vsel %vm472, %v634, 0
        %v686 = vsel %vm472, %v649, 0
        %v689 = vsel %vm472, %v664, 0
        %691 = vmatpush.msra.mxu0 0.0
        %692 = vmatpush.msra.mxu0 0.0
        %693 = vmatpush.msra.mxu0 0.0
        %694 = vmatpush.msra.mxu0 0.0
        %695 = vmatpush.msra.mxu0 0.0
        %696 = vmatpush.msra.mxu0 0.0
        %697 = vmatpush.msra.mxu0 0.0
        %698 = vmatpush.msra.mxu0 0.0
        %699 = vmatpush.msra.mxu0 0.0
        %700 = vmatpush.msra.mxu0 0.0
        %701 = vmatpush.msra.mxu0 0.0
        %702 = vmatpush.msra.mxu0 0.0
        %703 = vmatpush.msra.mxu0 0.0
        %704 = vmatpush.msra.mxu0 0.0
        %705 = vmatpush.msra.mxu0 0.0
        %706 = vmatpush.msra.mxu0 %v665
        %707 = vmatmul.f32.gmra.mxu0 %v668
        %v708 = vpop.f32.mrf.mxu0
        %v709 = vadd.f32 0.0, %v708
        %710 = vmatmul.f32.gmra.mxu0 %v671
        %v711 = vpop.f32.mrf.mxu0
        %v712 = vadd.f32 0.0, %v711
        %713 = vmatmul.f32.gmra.mxu0 %v674
        %v714 = vpop.f32.mrf.mxu0
        %v715 = vadd.f32 0.0, %v714
        %716 = vmatmul.f32.gmra.mxu0 %v677
        %v717 = vpop.f32.mrf.mxu0
        %v718 = vadd.f32 0.0, %v717
        %719 = vmatmul.f32.gmra.mxu0 %v680
        %v720 = vpop.f32.mrf.mxu0
        %v721 = vadd.f32 0.0, %v720
        %722 = vmatmul.f32.gmra.mxu0 %v683
        %v723 = vpop.f32.mrf.mxu0
        %v724 = vadd.f32 0.0, %v723
        %725 = vmatmul.f32.gmra.mxu0 %v686
        %v726 = vpop.f32.mrf.mxu0
        %v727 = vadd.f32 0.0, %v726
        %728 = vmatmul.f32.gmra.mxu0 %v689
        %v729 = vpop.f32.mrf.mxu0
        %v730 = vadd.f32 0.0, %v729
        %731 = vdwg.mxu0
        %732 = vmatpush.msra.mxu0 0.0
        %733 = vmatpush.msra.mxu0 0.0
        %734 = vmatpush.msra.mxu0 0.0
        %735 = vmatpush.msra.mxu0 0.0
        %736 = vmatpush.msra.mxu0 0.0
        %737 = vmatpush.msra.mxu0 0.0
        %738 = vmatpush.msra.mxu0 0.0
        %739 = vmatpush.msra.mxu0 0.0
        %740 = vmatpush.msra.mxu0 0.0
        %741 = vmatpush.msra.mxu0 0.0
        %742 = vmatpush.msra.mxu0 0.0
        %743 = vmatpush.msra.mxu0 0.0
        %744 = vmatpush.msra.mxu0 0.0
        %745 = vmatpush.msra.mxu0 0.0
        %746 = vmatpush.msra.mxu0 0.0
        %747 = vmatpush.msra.mxu0 %v666
        %748 = vmatmul.f32.gmra.mxu0 %v668
        %v749 = vpop.f32.mrf.mxu0
        %v750 = vadd.f32 0.0, %v749
        %751 = vmatmul.f32.gmra.mxu0 %v671
        %v752 = vpop.f32.mrf.mxu0
        %v753 = vadd.f32 0.0, %v752
        %754 = vmatmul.f32.gmra.mxu0 %v674
        %v755 = vpop.f32.mrf.mxu0
        %v756 = vadd.f32 0.0, %v755
        %757 = vmatmul.f32.gmra.mxu0 %v677
        %v758 = vpop.f32.mrf.mxu0
        %v759 = vadd.f32 0.0, %v758
        %760 = vmatmul.f32.gmra.mxu0 %v680
        %v761 = vpop.f32.mrf.mxu0
        %v762 = vadd.f32 0.0, %v761
        %763 = vmatmul.f32.gmra.mxu0 %v683
        %v764 = vpop.f32.mrf.mxu0
        %v765 = vadd.f32 0.0, %v764
        %766 = vmatmul.f32.gmra.mxu0 %v686
        %v767 = vpop.f32.mrf.mxu0
        %v768 = vadd.f32 0.0, %v767
        %769 = vmatmul.f32.gmra.mxu0 %v689
        %v770 = vpop.f32.mrf.mxu0
        %v771 = vadd.f32 0.0, %v770
        %772 = vdwg.mxu0
        %v773 = vmul.f32 %v341, %v709
        %v774 = vmul.f32 %v342, %v750
        %v775 = vmul.f32 %v343, %v712
        %v776 = vmul.f32 %v344, %v753
        %v777 = vmul.f32 %v345, %v715
        %v778 = vmul.f32 %v346, %v756
        %v779 = vmul.f32 %v347, %v718
        %v780 = vmul.f32 %v348, %v759
        %v781 = vmul.f32 %v349, %v721
        %v782 = vmul.f32 %v350, %v762
        %v783 = vmul.f32 %v351, %v724
        %v784 = vmul.f32 %v352, %v765
        %v785 = vmul.f32 %v353, %v727
        %v786 = vmul.f32 %v354, %v768
        %v787 = vmul.f32 %v355, %v730
        %v788 = vmul.f32 %v356, %v771
        %v789 = vld [vmem:[%s5] sm:$0xff]
        %v790 = vld [vmem:[%s5 + $0x8] sm:$0xff]
        %v791 = vld [vmem:[%s5 + $0x10] sm:$0xff]
        %v792 = vld [vmem:[%s5 + $0x18] sm:$0xff]
        %v793 = vld [vmem:[%s5 + $0x20] sm:$0xff]
        %v794 = vld [vmem:[%s5 + $0x28] sm:$0xff]
        %v795 = vld [vmem:[%s5 + $0x30] sm:$0xff]
        %v796 = vld [vmem:[%s5 + $0x38] sm:$0xff]
        %v797 = vld [vmem:[%s5 + $0x40] sm:$0xff]
        %v798 = vld [vmem:[%s5 + $0x48] sm:$0xff]
        %v799 = vld [vmem:[%s5 + $0x50] sm:$0xff]
        %v800 = vld [vmem:[%s5 + $0x58] sm:$0xff]
        %v801 = vld [vmem:[%s5 + $0x60] sm:$0xff]
        %v802 = vld [vmem:[%s5 + $0x68] sm:$0xff]
        %v803 = vld [vmem:[%s5 + $0x70] sm:$0xff]
        %v804 = vld [vmem:[%s5 + $0x78] sm:$0xff]
        %v805 = vld [vmem:[%s5 + $0x80] sm:$0xff]
        %v806 = vld [vmem:[%s5 + $0x88] sm:$0xff]
        %v807 = vld [vmem:[%s5 + $0x90] sm:$0xff]
        %v808 = vld [vmem:[%s5 + $0x98] sm:$0xff]
        %v809 = vld [vmem:[%s5 + $0xa0] sm:$0xff]
        %v810 = vld [vmem:[%s5 + $0xa8] sm:$0xff]
        %v811 = vld [vmem:[%s5 + $0xb0] sm:$0xff]
        %v812 = vld [vmem:[%s5 + $0xb8] sm:$0xff]
        %v813 = vld [vmem:[%s5 + $0xc0] sm:$0xff]
        %v814 = vld [vmem:[%s5 + $0xc8] sm:$0xff]
        %v815 = vld [vmem:[%s5 + $0xd0] sm:$0xff]
        %v816 = vld [vmem:[%s5 + $0xd8] sm:$0xff]
        %v817 = vld [vmem:[%s5 + $0xe0] sm:$0xff]
        %v818 = vld [vmem:[%s5 + $0xe8] sm:$0xff]
        %v819 = vld [vmem:[%s5 + $0xf0] sm:$0xff]
        %v820 = vld [vmem:[%s5 + $0xf8] sm:$0xff]
        %v821 = vld [vmem:[%s5 + $0x100] sm:$0xff]
        %v822 = vld [vmem:[%s5 + $0x108] sm:$0xff]
        %v823 = vld [vmem:[%s5 + $0x110] sm:$0xff]
        %v824 = vld [vmem:[%s5 + $0x118] sm:$0xff]
        %v825 = vld [vmem:[%s5 + $0x120] sm:$0xff]
        %v826 = vld [vmem:[%s5 + $0x128] sm:$0xff]
        %v827 = vld [vmem:[%s5 + $0x130] sm:$0xff]
        %v828 = vld [vmem:[%s5 + $0x138] sm:$0xff]
        %v829 = vld [vmem:[%s5 + $0x140] sm:$0xff]
        %v830 = vld [vmem:[%s5 + $0x148] sm:$0xff]
        %v831 = vld [vmem:[%s5 + $0x150] sm:$0xff]
        %v832 = vld [vmem:[%s5 + $0x158] sm:$0xff]
        %v833 = vld [vmem:[%s5 + $0x160] sm:$0xff]
        %v834 = vld [vmem:[%s5 + $0x168] sm:$0xff]
        %v835 = vld [vmem:[%s5 + $0x170] sm:$0xff]
        %v836 = vld [vmem:[%s5 + $0x178] sm:$0xff]
        %v837 = vld [vmem:[%s5 + $0x180] sm:$0xff]
        %v838 = vld [vmem:[%s5 + $0x188] sm:$0xff]
        %v839 = vld [vmem:[%s5 + $0x190] sm:$0xff]
        %v840 = vld [vmem:[%s5 + $0x198] sm:$0xff]
        %v841 = vld [vmem:[%s5 + $0x1a0] sm:$0xff]
        %v842 = vld [vmem:[%s5 + $0x1a8] sm:$0xff]
        %v843 = vld [vmem:[%s5 + $0x1b0] sm:$0xff]
        %v844 = vld [vmem:[%s5 + $0x1b8] sm:$0xff]
        %v845 = vld [vmem:[%s5 + $0x1c0] sm:$0xff]
        %v846 = vld [vmem:[%s5 + $0x1c8] sm:$0xff]
        %v847 = vld [vmem:[%s5 + $0x1d0] sm:$0xff]
        %v848 = vld [vmem:[%s5 + $0x1d8] sm:$0xff]
        %v849 = vld [vmem:[%s5 + $0x1e0] sm:$0xff]
        %v850 = vld [vmem:[%s5 + $0x1e8] sm:$0xff]
        %v851 = vld [vmem:[%s5 + $0x1f0] sm:$0xff]
        %v852 = vld [vmem:[%s5 + $0x1f8] sm:$0xff]
        %v853 = vld [vmem:[%s2] ss:$8 sm:$0x3]
        %v855 = vperm.slane %v853, 0
        %v856 = vperm.slane %v853, 1
        %859 = vmatpush.msra.mxu0 %v819
        %860 = vmatpush.msra.mxu0 %v817
        %861 = vmatpush.msra.mxu0 %v815
        %862 = vmatpush.msra.mxu0 %v813
        %863 = vmatpush.msra.mxu0 %v811
        %864 = vmatpush.msra.mxu0 %v809
        %865 = vmatpush.msra.mxu0 %v807
        %866 = vmatpush.msra.mxu0 %v805
        %867 = vmatpush.msra.mxu0 %v803
        %868 = vmatpush.msra.mxu0 %v801
        %869 = vmatpush.msra.mxu0 %v799
        %870 = vmatpush.msra.mxu0 %v797
        %871 = vmatpush.msra.mxu0 %v795
        %872 = vmatpush.msra.mxu0 %v793
        %873 = vmatpush.msra.mxu0 %v791
        %874 = vmatpush.msra.mxu0 %v789
        %875 = vmatmul.f32.gmra.mxu0 %v773
        %v876 = vpop.f32.mrf.mxu0
        %v877 = vadd.f32 %v855, %v876
        %878 = vmatmul.f32.gmra.mxu0 %v775
        %v879 = vpop.f32.mrf.mxu0
        %v880 = vadd.f32 %v855, %v879
        %881 = vmatmul.f32.gmra.mxu0 %v777
        %v882 = vpop.f32.mrf.mxu0
        %v883 = vadd.f32 %v855, %v882
        %884 = vmatmul.f32.gmra.mxu0 %v779
        %v885 = vpop.f32.mrf.mxu0
        %v886 = vadd.f32 %v855, %v885
        %887 = vmatmul.f32.gmra.mxu0 %v781
        %v888 = vpop.f32.mrf.mxu0
        %v889 = vadd.f32 %v855, %v888
        %890 = vmatmul.f32.gmra.mxu0 %v783
        %v891 = vpop.f32.mrf.mxu0
        %v892 = vadd.f32 %v855, %v891
        %893 = vmatmul.f32.gmra.mxu0 %v785
        %v894 = vpop.f32.mrf.mxu0
        %v895 = vadd.f32 %v855, %v894
        %896 = vmatmul.f32.gmra.mxu0 %v787
        %v897 = vpop.f32.mrf.mxu0
        %v898 = vadd.f32 %v855, %v897
        %899 = vdwg.mxu0
        %900 = vmatpush.msra.mxu0 %v851
        %901 = vmatpush.msra.mxu0 %v849
        %902 = vmatpush.msra.mxu0 %v847
        %903 = vmatpush.msra.mxu0 %v845
        %904 = vmatpush.msra.mxu0 %v843
        %905 = vmatpush.msra.mxu0 %v841
        %906 = vmatpush.msra.mxu0 %v839
        %907 = vmatpush.msra.mxu0 %v837
        %908 = vmatpush.msra.mxu0 %v835
        %909 = vmatpush.msra.mxu0 %v833
        %910 = vmatpush.msra.mxu0 %v831
        %911 = vmatpush.msra.mxu0 %v829
        %912 = vmatpush.msra.mxu0 %v827
        %913 = vmatpush.msra.mxu0 %v825
        %914 = vmatpush.msra.mxu0 %v823
        %915 = vmatpush.msra.mxu0 %v821
        %916 = vmatmul.f32.gmra.mxu0 %v774
        %v917 = vpop.f32.mrf.mxu0
        %v918 = vadd.f32 %v877, %v917
        %919 = vmatmul.f32.gmra.mxu0 %v776
        %v920 = vpop.f32.mrf.mxu0
        %v921 = vadd.f32 %v880, %v920
        %922 = vmatmul.f32.gmra.mxu0 %v778
        %v923 = vpop.f32.mrf.mxu0
        %v924 = vadd.f32 %v883, %v923
        %925 = vmatmul.f32.gmra.mxu0 %v780
        %v926 = vpop.f32.mrf.mxu0
        %v927 = vadd.f32 %v886, %v926
        %928 = vmatmul.f32.gmra.mxu0 %v782
        %v929 = vpop.f32.mrf.mxu0
        %v930 = vadd.f32 %v889, %v929
        %931 = vmatmul.f32.gmra.mxu0 %v784
        %v932 = vpop.f32.mrf.mxu0
        %v933 = vadd.f32 %v892, %v932
        %934 = vmatmul.f32.gmra.mxu0 %v786
        %v935 = vpop.f32.mrf.mxu0
        %v936 = vadd.f32 %v895, %v935
        %937 = vmatmul.f32.gmra.mxu0 %v788
        %v938 = vpop.f32.mrf.mxu0
        %v939 = vadd.f32 %v898, %v938
        %940 = vdwg.mxu0
        %941 = vmatpush.msra.mxu0 %v820
        %942 = vmatpush.msra.mxu0 %v818
        %943 = vmatpush.msra.mxu0 %v816
        %944 = vmatpush.msra.mxu0 %v814
        %945 = vmatpush.msra.mxu0 %v812
        %946 = vmatpush.msra.mxu0 %v810
        %947 = vmatpush.msra.mxu0 %v808
        %948 = vmatpush.msra.mxu0 %v806
        %949 = vmatpush.msra.mxu0 %v804
        %950 = vmatpush.msra.mxu0 %v802
        %951 = vmatpush.msra.mxu0 %v800
        %952 = vmatpush.msra.mxu0 %v798
        %953 = vmatpush.msra.mxu0 %v796
        %954 = vmatpush.msra.mxu0 %v794
        %955 = vmatpush.msra.mxu0 %v792
        %956 = vmatpush.msra.mxu0 %v790
        %957 = vmatmul.f32.gmra.mxu0 %v773
        %v958 = vpop.f32.mrf.mxu0
        %v959 = vadd.f32 %v856, %v958
        %960 = vmatmul.f32.gmra.mxu0 %v775
        %v961 = vpop.f32.mrf.mxu0
        %v962 = vadd.f32 %v856, %v961
        %963 = vmatmul.f32.gmra.mxu0 %v777
        %v964 = vpop.f32.mrf.mxu0
        %v965 = vadd.f32 %v856, %v964
        %966 = vmatmul.f32.gmra.mxu0 %v779
        %v967 = vpop.f32.mrf.mxu0
        %v968 = vadd.f32 %v856, %v967
        %969 = vmatmul.f32.gmra.mxu0 %v781
        %v970 = vpop.f32.mrf.mxu0
        %v971 = vadd.f32 %v856, %v970
        %972 = vmatmul.f32.gmra.mxu0 %v783
        %v973 = vpop.f32.mrf.mxu0
        %v974 = vadd.f32 %v856, %v973
        %975 = vmatmul.f32.gmra.mxu0 %v785
        %v976 = vpop.f32.mrf.mxu0
        %v977 = vadd.f32 %v856, %v976
        %978 = vmatmul.f32.gmra.mxu0 %v787
        %v979 = vpop.f32.mrf.mxu0
        %v980 = vadd.f32 %v856, %v979
        %981 = vdwg.mxu0
        %982 = vmatpush.msra.mxu0 %v852
        %983 = vmatpush.msra.mxu0 %v850
        %984 = vmatpush.msra.mxu0 %v848
        %985 = vmatpush.msra.mxu0 %v846
        %986 = vmatpush.msra.mxu0 %v844
        %987 = vmatpush.msra.mxu0 %v842
        %988 = vmatpush.msra.mxu0 %v840
        %989 = vmatpush.msra.mxu0 %v838
        %990 = vmatpush.msra.mxu0 %v836
        %991 = vmatpush.msra.mxu0 %v834
        %992 = vmatpush.msra.mxu0 %v832
        %993 = vmatpush.msra.mxu0 %v830
        %994 = vmatpush.msra.mxu0 %v828
        %995 = vmatpush.msra.mxu0 %v826
        %996 = vmatpush.msra.mxu0 %v824
        %997 = vmatpush.msra.mxu0 %v822
        %998 = vmatmul.f32.gmra.mxu0 %v774
        %v999 = vpop.f32.mrf.mxu0
        %v1000 = vadd.f32 %v959, %v999
        %1001 = vmatmul.f32.gmra.mxu0 %v776
        %v1002 = vpop.f32.mrf.mxu0
        %v1003 = vadd.f32 %v962, %v1002
        %1004 = vmatmul.f32.gmra.mxu0 %v778
        %v1005 = vpop.f32.mrf.mxu0
        %v1006 = vadd.f32 %v965, %v1005
        %1007 = vmatmul.f32.gmra.mxu0 %v780
        %v1008 = vpop.f32.mrf.mxu0
        %v1009 = vadd.f32 %v968, %v1008
        %1010 = vmatmul.f32.gmra.mxu0 %v782
        %v1011 = vpop.f32.mrf.mxu0
        %v1012 = vadd.f32 %v971, %v1011
        %1013 = vmatmul.f32.gmra.mxu0 %v784
        %v1014 = vpop.f32.mrf.mxu0
        %v1015 = vadd.f32 %v974, %v1014
        %1016 = vmatmul.f32.gmra.mxu0 %v786
        %v1017 = vpop.f32.mrf.mxu0
        %v1018 = vadd.f32 %v977, %v1017
        %1019 = vmatmul.f32.gmra.mxu0 %v788
        %v1020 = vpop.f32.mrf.mxu0
        %v1021 = vadd.f32 %v980, %v1020
        %1022 = vdwg.mxu0
        %v1023 = vmax.f32 %v918, 0.0
        %v1024 = vmax.f32 %v1000, 0.0
        %v1025 = vmax.f32 %v921, 0.0
        %v1026 = vmax.f32 %v1003, 0.0
        %v1027 = vmax.f32 %v924, 0.0
        %v1028 = vmax.f32 %v1006, 0.0
        %v1029 = vmax.f32 %v927, 0.0
        %v1030 = vmax.f32 %v1009, 0.0
        %v1031 = vmax.f32 %v930, 0.0
        %v1032 = vmax.f32 %v1012, 0.0
        %v1033 = vmax.f32 %v933, 0.0
        %v1034 = vmax.f32 %v1015, 0.0
        %v1035 = vmax.f32 %v936, 0.0
        %v1036 = vmax.f32 %v1018, 0.0
        %v1037 = vmax.f32 %v939, 0.0
        %v1038 = vmax.f32 %v1021, 0.0
        %v1039 = vadd.f32 %v1023, %v1024
        %1040 = vadd.xlane.f32.xlu0 %v1039
        %v1041 = vpop.xlane.xlu0 %1040
        %v1042 = vadd.f32 %v1025, %v1026
        %1043 = vadd.xlane.f32.xlu0 %v1042
        %v1044 = vpop.xlane.xlu0 %1043
        %v1045 = vadd.f32 %v1027, %v1028
        %1046 = vadd.xlane.f32.xlu0 %v1045
        %v1047 = vpop.xlane.xlu0 %1046
        %v1048 = vadd.f32 %v1029, %v1030
        %1049 = vadd.xlane.f32.xlu0 %v1048
        %v1050 = vpop.xlane.xlu0 %1049
        %v1051 = vadd.f32 %v1031, %v1032
        %1052 = vadd.xlane.f32.xlu0 %v1051
        %v1053 = vpop.xlane.xlu0 %1052
        %v1054 = vadd.f32 %v1033, %v1034
        %1055 = vadd.xlane.f32.xlu0 %v1054
        %v1056 = vpop.xlane.xlu0 %1055
        %v1057 = vadd.f32 %v1035, %v1036
        %1058 = vadd.xlane.f32.xlu0 %v1057
        %v1059 = vpop.xlane.xlu0 %1058
        %v1060 = vadd.f32 %v1037, %v1038
        %1061 = vadd.xlane.f32.xlu0 %v1060
        %v1062 = vpop.xlane.xlu0 %1061
        %v1063 = vrcp.pop 256.0
        %v1064 = vmul.f32 256.0, %v1063
        %v1065 = vsub.f32 1.0, %v1064
        %v1066 = vmul.f32 %v1063, %v1065
        %v1067 = vadd.f32 %v1063, %v1066
        %vm1068 = vweird.f32 %v1063
        %v1069 = vsel %vm1068, %v1063, %v1067
        %v1070 = vmul.f32 %v1041, %v1069
        %v1071 = vmul.f32 %v1044, %v1069
        %v1072 = vmul.f32 %v1047, %v1069
        %v1073 = vmul.f32 %v1050, %v1069
        %v1074 = vmul.f32 %v1053, %v1069
        %v1075 = vmul.f32 %v1056, %v1069
        %v1076 = vmul.f32 %v1059, %v1069
        %v1077 = vmul.f32 %v1062, %v1069
        %v1078 = vmul.f32 %v1023, %v1023
        %v1079 = vmul.f32 %v1024, %v1024
        %v1080 = vmul.f32 %v1025, %v1025
        %v1081 = vmul.f32 %v1026, %v1026
        %v1082 = vmul.f32 %v1027, %v1027
        %v1083 = vmul.f32 %v1028, %v1028
        %v1084 = vmul.f32 %v1029, %v1029
        %v1085 = vmul.f32 %v1030, %v1030
        %v1086 = vmul.f32 %v1031, %v1031
        %v1087 = vmul.f32 %v1032, %v1032
        %v1088 = vmul.f32 %v1033, %v1033
        %v1089 = vmul.f32 %v1034, %v1034
        %v1090 = vmul.f32 %v1035, %v1035
        %v1091 = vmul.f32 %v1036, %v1036
        %v1092 = vmul.f32 %v1037, %v1037
        %v1093 = vmul.f32 %v1038, %v1038
        %v1094 = vadd.f32 %v1078, %v1079
        %1095 = vadd.xlane.f32.xlu0 %v1094
        %v1096 = vpop.xlane.xlu0 %1095
        %v1097 = vadd.f32 %v1080, %v1081
        %1098 = vadd.xlane.f32.xlu0 %v1097
        %v1099 = vpop.xlane.xlu0 %1098
        %v1100 = vadd.f32 %v1082, %v1083
        %1101 = vadd.xlane.f32.xlu0 %v1100
        %v1102 = vpop.xlane.xlu0 %1101
        %v1103 = vadd.f32 %v1084, %v1085
        %1104 = vadd.xlane.f32.xlu0 %v1103
        %v1105 = vpop.xlane.xlu0 %1104
        %v1106 = vadd.f32 %v1086, %v1087
        %1107 = vadd.xlane.f32.xlu0 %v1106
        %v1108 = vpop.xlane.xlu0 %1107
        %v1109 = vadd.f32 %v1088, %v1089
        %1110 = vadd.xlane.f32.xlu0 %v1109
        %v1111 = vpop.xlane.xlu0 %1110
        %v1112 = vadd.f32 %v1090, %v1091
        %1113 = vadd.xlane.f32.xlu0 %v1112
        %v1114 = vpop.xlane.xlu0 %1113
        %v1115 = vadd.f32 %v1092, %v1093
        %1116 = vadd.xlane.f32.xlu0 %v1115
        %v1117 = vpop.xlane.xlu0 %1116
        %v1118 = vmul.f32 %v1096, %v1069
        %v1119 = vmul.f32 %v1099, %v1069
        %v1120 = vmul.f32 %v1102, %v1069
        %v1121 = vmul.f32 %v1105, %v1069
        %v1122 = vmul.f32 %v1108, %v1069
        %v1123 = vmul.f32 %v1111, %v1069
        %v1124 = vmul.f32 %v1114, %v1069
        %v1125 = vmul.f32 %v1117, %v1069
        %v1126 = vmul.f32 %v1070, %v1070
        %v1127 = vmul.f32 %v1071, %v1071
        %v1128 = vmul.f32 %v1072, %v1072
        %v1129 = vmul.f32 %v1073, %v1073
        %v1130 = vmul.f32 %v1074, %v1074
        %v1131 = vmul.f32 %v1075, %v1075
        %v1132 = vmul.f32 %v1076, %v1076
        %v1133 = vmul.f32 %v1077, %v1077
        %v1134 = vsub.f32 %v1118, %v1126
        %v1135 = vsub.f32 %v1119, %v1127
        %v1136 = vsub.f32 %v1120, %v1128
        %v1137 = vsub.f32 %v1121, %v1129
        %v1138 = vsub.f32 %v1122, %v1130
        %v1139 = vsub.f32 %v1123, %v1131
        %v1140 = vsub.f32 %v1124, %v1132
        %v1141 = vsub.f32 %v1125, %v1133
        %v1142 = vsub.f32 %v1023, %v1070
        %v1143 = vsub.f32 %v1024, %v1070
        %v1144 = vsub.f32 %v1025, %v1071
        %v1145 = vsub.f32 %v1026, %v1071
        %v1146 = vsub.f32 %v1027, %v1072
        %v1147 = vsub.f32 %v1028, %v1072
        %v1148 = vsub.f32 %v1029, %v1073
        %v1149 = vsub.f32 %v1030, %v1073
        %v1150 = vsub.f32 %v1031, %v1074
        %v1151 = vsub.f32 %v1032, %v1074
        %v1152 = vsub.f32 %v1033, %v1075
        %v1153 = vsub.f32 %v1034, %v1075
        %v1154 = vsub.f32 %v1035, %v1076
        %v1155 = vsub.f32 %v1036, %v1076
        %v1156 = vsub.f32 %v1037, %v1077
        %v1157 = vsub.f32 %v1038, %v1077
        %v1158 = vadd.f32 %v1134, 1e-05
        %v1159 = vadd.f32 %v1135, 1e-05
        %v1160 = vadd.f32 %v1136, 1e-05
        %v1161 = vadd.f32 %v1137, 1e-05
        %v1162 = vadd.f32 %v1138, 1e-05
        %v1163 = vadd.f32 %v1139, 1e-05
        %v1164 = vadd.f32 %v1140, 1e-05
        %v1165 = vadd.f32 %v1141, 1e-05
        %v1166 = vrsqrt.pop %v1158
        %v1167 = vmul.f32 %v1166, %v1158
        %v1168 = vmul.f32 %v1167, %v1166
        %v1169 = vmul.f32 0.5, %v1168
        %v1170 = vsub.f32 1.5, %v1169
        %v1171 = vmul.f32 %v1166, %v1170
        %vm1172 = vweird.f32 %v1158
        %vm1173 = vweird.f32 %v1166
        %vm1174 = vmor %vm1172, %vm1173
        %v1175 = vsel %vm1174, %v1166, %v1171
        %v1176 = vrsqrt.pop %v1159
        %v1177 = vmul.f32 %v1176, %v1159
        %v1178 = vmul.f32 %v1177, %v1176
        %v1179 = vmul.f32 0.5, %v1178
        %v1180 = vsub.f32 1.5, %v1179
        %v1181 = vmul.f32 %v1176, %v1180
        %vm1182 = vweird.f32 %v1159
        %vm1183 = vweird.f32 %v1176
        %vm1184 = vmor %vm1182, %vm1183
        %v1185 = vsel %vm1184, %v1176, %v1181
        %v1186 = vrsqrt.pop %v1160
        %v1187 = vmul.f32 %v1186, %v1160
        %v1188 = vmul.f32 %v1187, %v1186
        %v1189 = vmul.f32 0.5, %v1188
        %v1190 = vsub.f32 1.5, %v1189
        %v1191 = vmul.f32 %v1186, %v1190
        %vm1192 = vweird.f32 %v1160
        %vm1193 = vweird.f32 %v1186
        %vm1194 = vmor %vm1192, %vm1193
        %v1195 = vsel %vm1194, %v1186, %v1191
        %v1196 = vrsqrt.pop %v1161
        %v1197 = vmul.f32 %v1196, %v1161
        %v1198 = vmul.f32 %v1197, %v1196
        %v1199 = vmul.f32 0.5, %v1198
        %v1200 = vsub.f32 1.5, %v1199
        %v1201 = vmul.f32 %v1196, %v1200
        %vm1202 = vweird.f32 %v1161
        %vm1203 = vweird.f32 %v1196
        %vm1204 = vmor %vm1202, %vm1203
        %v1205 = vsel %vm1204, %v1196, %v1201
        %v1206 = vrsqrt.pop %v1162
        %v1207 = vmul.f32 %v1206, %v1162
        %v1208 = vmul.f32 %v1207, %v1206
        %v1209 = vmul.f32 0.5, %v1208
        %v1210 = vsub.f32 1.5, %v1209
        %v1211 = vmul.f32 %v1206, %v1210
        %vm1212 = vweird.f32 %v1162
        %vm1213 = vweird.f32 %v1206
        %vm1214 = vmor %vm1212, %vm1213
        %v1215 = vsel %vm1214, %v1206, %v1211
        %v1216 = vrsqrt.pop %v1163
        %v1217 = vmul.f32 %v1216, %v1163
        %v1218 = vmul.f32 %v1217, %v1216
        %v1219 = vmul.f32 0.5, %v1218
        %v1220 = vsub.f32 1.5, %v1219
        %v1221 = vmul.f32 %v1216, %v1220
        %vm1222 = vweird.f32 %v1163
        %vm1223 = vweird.f32 %v1216
        %vm1224 = vmor %vm1222, %vm1223
        %v1225 = vsel %vm1224, %v1216, %v1221
        %v1226 = vrsqrt.pop %v1164
        %v1227 = vmul.f32 %v1226, %v1164
        %v1228 = vmul.f32 %v1227, %v1226
        %v1229 = vmul.f32 0.5, %v1228
        %v1230 = vsub.f32 1.5, %v1229
        %v1231 = vmul.f32 %v1226, %v1230
        %vm1232 = vweird.f32 %v1164
        %vm1233 = vweird.f32 %v1226
        %vm1234 = vmor %vm1232, %vm1233
        %v1235 = vsel %vm1234, %v1226, %v1231
        %v1236 = vrsqrt.pop %v1165
        %v1237 = vmul.f32 %v1236, %v1165
        %v1238 = vmul.f32 %v1237, %v1236
        %v1239 = vmul.f32 0.5, %v1238
        %v1240 = vsub.f32 1.5, %v1239
        %v1241 = vmul.f32 %v1236, %v1240
        %vm1242 = vweird.f32 %v1165
        %vm1243 = vweird.f32 %v1236
        %vm1244 = vmor %vm1242, %vm1243
        %v1245 = vsel %vm1244, %v1236, %v1241
        %v1246 = vmul.f32 %v1142, %v1175
        %v1247 = vmul.f32 %v1143, %v1175
        %v1248 = vmul.f32 %v1144, %v1185
        %v1249 = vmul.f32 %v1145, %v1185
        %v1250 = vmul.f32 %v1146, %v1195
        %v1251 = vmul.f32 %v1147, %v1195
        %v1252 = vmul.f32 %v1148, %v1205
        %v1253 = vmul.f32 %v1149, %v1205
        %v1254 = vmul.f32 %v1150, %v1215
        %v1255 = vmul.f32 %v1151, %v1215
        %v1256 = vmul.f32 %v1152, %v1225
        %v1257 = vmul.f32 %v1153, %v1225
        %v1258 = vmul.f32 %v1154, %v1235
        %v1259 = vmul.f32 %v1155, %v1235
        %v1260 = vmul.f32 %v1156, %v1245
        %v1261 = vmul.f32 %v1157, %v1245
        %s1262 = scalar_lea.vmem %s2, 1
        %v1263 = vld [vmem:[%s1262] ss:$8 sm:$0x3]
        %v1265 = vperm.slane %v1263, 0
        %v1266 = vperm.slane %v1263, 1
        %v1269 = vmul.f32 %v1246, %v1265
        %v1270 = vmul.f32 %v1247, %v1266
        %v1271 = vmul.f32 %v1248, %v1265
        %v1272 = vmul.f32 %v1249, %v1266
        %v1273 = vmul.f32 %v1250, %v1265
        %v1274 = vmul.f32 %v1251, %v1266
        %v1275 = vmul.f32 %v1252, %v1265
        %v1276 = vmul.f32 %v1253, %v1266
        %v1277 = vmul.f32 %v1254, %v1265
        %v1278 = vmul.f32 %v1255, %v1266
        %v1279 = vmul.f32 %v1256, %v1265
        %v1280 = vmul.f32 %v1257, %v1266
        %v1281 = vmul.f32 %v1258, %v1265
        %v1282 = vmul.f32 %v1259, %v1266
        %v1283 = vmul.f32 %v1260, %v1265
        %v1284 = vmul.f32 %v1261, %v1266
        %s1285 = scalar_lea.vmem %s2, 2
        %v1286 = vld [vmem:[%s1285] ss:$8 sm:$0x3]
        %v1288 = vperm.slane %v1286, 0
        %v1289 = vperm.slane %v1286, 1
        %v1292 = vadd.f32 %v1269, %v1288
        %v1293 = vadd.f32 %v1270, %v1289
        %v1294 = vadd.f32 %v1271, %v1288
        %v1295 = vadd.f32 %v1272, %v1289
        %v1296 = vadd.f32 %v1273, %v1288
        %v1297 = vadd.f32 %v1274, %v1289
        %v1298 = vadd.f32 %v1275, %v1288
        %v1299 = vadd.f32 %v1276, %v1289
        %v1300 = vadd.f32 %v1277, %v1288
        %v1301 = vadd.f32 %v1278, %v1289
        %v1302 = vadd.f32 %v1279, %v1288
        %v1303 = vadd.f32 %v1280, %v1289
        %v1304 = vadd.f32 %v1281, %v1288
        %v1305 = vadd.f32 %v1282, %v1289
        %v1306 = vadd.f32 %v1283, %v1288
        %v1307 = vadd.f32 %v1284, %v1289
        %v1308 = vld [vmem:[%s6] sm:$0xff]
        %v1309 = vld [vmem:[%s6 + $0x8] sm:$0xff]
        %v1310 = vld [vmem:[%s6 + $0x10] sm:$0xff]
        %v1311 = vld [vmem:[%s6 + $0x18] sm:$0xff]
        %v1312 = vld [vmem:[%s6 + $0x20] sm:$0xff]
        %v1313 = vld [vmem:[%s6 + $0x28] sm:$0xff]
        %v1314 = vld [vmem:[%s6 + $0x30] sm:$0xff]
        %v1315 = vld [vmem:[%s6 + $0x38] sm:$0xff]
        %v1316 = vld [vmem:[%s6 + $0x40] sm:$0xff]
        %v1317 = vld [vmem:[%s6 + $0x48] sm:$0xff]
        %v1318 = vld [vmem:[%s6 + $0x50] sm:$0xff]
        %v1319 = vld [vmem:[%s6 + $0x58] sm:$0xff]
        %v1320 = vld [vmem:[%s6 + $0x60] sm:$0xff]
        %v1321 = vld [vmem:[%s6 + $0x68] sm:$0xff]
        %v1322 = vld [vmem:[%s6 + $0x70] sm:$0xff]
        %v1323 = vld [vmem:[%s6 + $0x78] sm:$0xff]
        %v1324 = vld [vmem:[%s6 + $0x80] sm:$0xff]
        %v1325 = vld [vmem:[%s6 + $0x88] sm:$0xff]
        %v1326 = vld [vmem:[%s6 + $0x90] sm:$0xff]
        %v1327 = vld [vmem:[%s6 + $0x98] sm:$0xff]
        %v1328 = vld [vmem:[%s6 + $0xa0] sm:$0xff]
        %v1329 = vld [vmem:[%s6 + $0xa8] sm:$0xff]
        %v1330 = vld [vmem:[%s6 + $0xb0] sm:$0xff]
        %v1331 = vld [vmem:[%s6 + $0xb8] sm:$0xff]
        %v1332 = vld [vmem:[%s6 + $0xc0] sm:$0xff]
        %v1333 = vld [vmem:[%s6 + $0xc8] sm:$0xff]
        %v1334 = vld [vmem:[%s6 + $0xd0] sm:$0xff]
        %v1335 = vld [vmem:[%s6 + $0xd8] sm:$0xff]
        %v1336 = vld [vmem:[%s6 + $0xe0] sm:$0xff]
        %v1337 = vld [vmem:[%s6 + $0xe8] sm:$0xff]
        %v1338 = vld [vmem:[%s6 + $0xf0] sm:$0xff]
        %v1339 = vld [vmem:[%s6 + $0xf8] sm:$0xff]
        %v1340 = vld [vmem:[%s2 + $0x3] ss:$0 sm:$0xff]
        %1341 = vmatpush.msra.mxu0 %v1323
        %1342 = vmatpush.msra.mxu0 %v1322
        %1343 = vmatpush.msra.mxu0 %v1321
        %1344 = vmatpush.msra.mxu0 %v1320
        %1345 = vmatpush.msra.mxu0 %v1319
        %1346 = vmatpush.msra.mxu0 %v1318
        %1347 = vmatpush.msra.mxu0 %v1317
        %1348 = vmatpush.msra.mxu0 %v1316
        %1349 = vmatpush.msra.mxu0 %v1315
        %1350 = vmatpush.msra.mxu0 %v1314
        %1351 = vmatpush.msra.mxu0 %v1313
        %1352 = vmatpush.msra.mxu0 %v1312
        %1353 = vmatpush.msra.mxu0 %v1311
        %1354 = vmatpush.msra.mxu0 %v1310
        %1355 = vmatpush.msra.mxu0 %v1309
        %1356 = vmatpush.msra.mxu0 %v1308
        %1357 = vmatmul.f32.gmra.mxu0 %v1292
        %v1358 = vpop.f32.mrf.mxu0
        %v1359 = vadd.f32 %v1340, %v1358
        %1360 = vmatmul.f32.gmra.mxu0 %v1294
        %v1361 = vpop.f32.mrf.mxu0
        %v1362 = vadd.f32 %v1340, %v1361
        %1363 = vmatmul.f32.gmra.mxu0 %v1296
        %v1364 = vpop.f32.mrf.mxu0
        %v1365 = vadd.f32 %v1340, %v1364
        %1366 = vmatmul.f32.gmra.mxu0 %v1298
        %v1367 = vpop.f32.mrf.mxu0
        %v1368 = vadd.f32 %v1340, %v1367
        %1369 = vmatmul.f32.gmra.mxu0 %v1300
        %v1370 = vpop.f32.mrf.mxu0
        %v1371 = vadd.f32 %v1340, %v1370
        %1372 = vmatmul.f32.gmra.mxu0 %v1302
        %v1373 = vpop.f32.mrf.mxu0
        %v1374 = vadd.f32 %v1340, %v1373
        %1375 = vmatmul.f32.gmra.mxu0 %v1304
        %v1376 = vpop.f32.mrf.mxu0
        %v1377 = vadd.f32 %v1340, %v1376
        %1378 = vmatmul.f32.gmra.mxu0 %v1306
        %v1379 = vpop.f32.mrf.mxu0
        %v1380 = vadd.f32 %v1340, %v1379
        %1381 = vdwg.mxu0
        %1382 = vmatpush.msra.mxu0 %v1339
        %1383 = vmatpush.msra.mxu0 %v1338
        %1384 = vmatpush.msra.mxu0 %v1337
        %1385 = vmatpush.msra.mxu0 %v1336
        %1386 = vmatpush.msra.mxu0 %v1335
        %1387 = vmatpush.msra.mxu0 %v1334
        %1388 = vmatpush.msra.mxu0 %v1333
        %1389 = vmatpush.msra.mxu0 %v1332
        %1390 = vmatpush.msra.mxu0 %v1331
        %1391 = vmatpush.msra.mxu0 %v1330
        %1392 = vmatpush.msra.mxu0 %v1329
        %1393 = vmatpush.msra.mxu0 %v1328
        %1394 = vmatpush.msra.mxu0 %v1327
        %1395 = vmatpush.msra.mxu0 %v1326
        %1396 = vmatpush.msra.mxu0 %v1325
        %1397 = vmatpush.msra.mxu0 %v1324
        %1398 = vmatmul.f32.gmra.mxu0 %v1293
        %v1399 = vpop.f32.mrf.mxu0
        %v1400 = vadd.f32 %v1359, %v1399
        %1401 = vmatmul.f32.gmra.mxu0 %v1295
        %v1402 = vpop.f32.mrf.mxu0
        %v1403 = vadd.f32 %v1362, %v1402
        %1404 = vmatmul.f32.gmra.mxu0 %v1297
        %v1405 = vpop.f32.mrf.mxu0
        %v1406 = vadd.f32 %v1365, %v1405
        %1407 = vmatmul.f32.gmra.mxu0 %v1299
        %v1408 = vpop.f32.mrf.mxu0
        %v1409 = vadd.f32 %v1368, %v1408
        %1410 = vmatmul.f32.gmra.mxu0 %v1301
        %v1411 = vpop.f32.mrf.mxu0
        %v1412 = vadd.f32 %v1371, %v1411
        %1413 = vmatmul.f32.gmra.mxu0 %v1303
        %v1414 = vpop.f32.mrf.mxu0
        %v1415 = vadd.f32 %v1374, %v1414
        %1416 = vmatmul.f32.gmra.mxu0 %v1305
        %v1417 = vpop.f32.mrf.mxu0
        %v1418 = vadd.f32 %v1377, %v1417
        %1419 = vmatmul.f32.gmra.mxu0 %v1307
        %v1420 = vpop.f32.mrf.mxu0
        %v1421 = vadd.f32 %v1380, %v1420
        %1422 = vdwg.mxu0
        %v1423 = vmax.f32 %v1400, 0.0
        %v1424 = vmax.f32 %v1403, 0.0
        %v1425 = vmax.f32 %v1406, 0.0
        %v1426 = vmax.f32 %v1409, 0.0
        %v1427 = vmax.f32 %v1412, 0.0
        %v1428 = vmax.f32 %v1415, 0.0
        %v1429 = vmax.f32 %v1418, 0.0
        %v1430 = vmax.f32 %v1421, 0.0
        %1431 = vadd.xlane.f32.xlu0 %v1423
        %v1432 = vpop.xlane.xlu0 %1431
        %1433 = vadd.xlane.f32.xlu0 %v1424
        %v1434 = vpop.xlane.xlu0 %1433
        %1435 = vadd.xlane.f32.xlu0 %v1425
        %v1436 = vpop.xlane.xlu0 %1435
        %1437 = vadd.xlane.f32.xlu0 %v1426
        %v1438 = vpop.xlane.xlu0 %1437
        %1439 = vadd.xlane.f32.xlu0 %v1427
        %v1440 = vpop.xlane.xlu0 %1439
        %1441 = vadd.xlane.f32.xlu0 %v1428
        %v1442 = vpop.xlane.xlu0 %1441
        %1443 = vadd.xlane.f32.xlu0 %v1429
        %v1444 = vpop.xlane.xlu0 %1443
        %1445 = vadd.xlane.f32.xlu0 %v1430
        %v1446 = vpop.xlane.xlu0 %1445
        %v1447 = vrcp.pop 128.0
        %v1448 = vmul.f32 128.0, %v1447
        %v1449 = vsub.f32 1.0, %v1448
        %v1450 = vmul.f32 %v1447, %v1449
        %v1451 = vadd.f32 %v1447, %v1450
        %vm1452 = vweird.f32 %v1447
        %v1453 = vsel %vm1452, %v1447, %v1451
        %v1454 = vmul.f32 %v1432, %v1453
        %v1455 = vmul.f32 %v1434, %v1453
        %v1456 = vmul.f32 %v1436, %v1453
        %v1457 = vmul.f32 %v1438, %v1453
        %v1458 = vmul.f32 %v1440, %v1453
        %v1459 = vmul.f32 %v1442, %v1453
        %v1460 = vmul.f32 %v1444, %v1453
        %v1461 = vmul.f32 %v1446, %v1453
        %v1462 = vmul.f32 %v1423, %v1423
        %v1463 = vmul.f32 %v1424, %v1424
        %v1464 = vmul.f32 %v1425, %v1425
        %v1465 = vmul.f32 %v1426, %v1426
        %v1466 = vmul.f32 %v1427, %v1427
        %v1467 = vmul.f32 %v1428, %v1428
        %v1468 = vmul.f32 %v1429, %v1429
        %v1469 = vmul.f32 %v1430, %v1430
        %1470 = vadd.xlane.f32.xlu0 %v1462
        %v1471 = vpop.xlane.xlu0 %1470
        %1472 = vadd.xlane.f32.xlu0 %v1463
        %v1473 = vpop.xlane.xlu0 %1472
        %1474 = vadd.xlane.f32.xlu0 %v1464
        %v1475 = vpop.xlane.xlu0 %1474
        %1476 = vadd.xlane.f32.xlu0 %v1465
        %v1477 = vpop.xlane.xlu0 %1476
        %1478 = vadd.xlane.f32.xlu0 %v1466
        %v1479 = vpop.xlane.xlu0 %1478
        %1480 = vadd.xlane.f32.xlu0 %v1467
        %v1481 = vpop.xlane.xlu0 %1480
        %1482 = vadd.xlane.f32.xlu0 %v1468
        %v1483 = vpop.xlane.xlu0 %1482
        %1484 = vadd.xlane.f32.xlu0 %v1469
        %v1485 = vpop.xlane.xlu0 %1484
        %v1486 = vmul.f32 %v1471, %v1453
        %v1487 = vmul.f32 %v1473, %v1453
        %v1488 = vmul.f32 %v1475, %v1453
        %v1489 = vmul.f32 %v1477, %v1453
        %v1490 = vmul.f32 %v1479, %v1453
        %v1491 = vmul.f32 %v1481, %v1453
        %v1492 = vmul.f32 %v1483, %v1453
        %v1493 = vmul.f32 %v1485, %v1453
        %v1494 = vmul.f32 %v1454, %v1454
        %v1495 = vmul.f32 %v1455, %v1455
        %v1496 = vmul.f32 %v1456, %v1456
        %v1497 = vmul.f32 %v1457, %v1457
        %v1498 = vmul.f32 %v1458, %v1458
        %v1499 = vmul.f32 %v1459, %v1459
        %v1500 = vmul.f32 %v1460, %v1460
        %v1501 = vmul.f32 %v1461, %v1461
        %v1502 = vsub.f32 %v1486, %v1494
        %v1503 = vsub.f32 %v1487, %v1495
        %v1504 = vsub.f32 %v1488, %v1496
        %v1505 = vsub.f32 %v1489, %v1497
        %v1506 = vsub.f32 %v1490, %v1498
        %v1507 = vsub.f32 %v1491, %v1499
        %v1508 = vsub.f32 %v1492, %v1500
        %v1509 = vsub.f32 %v1493, %v1501
        %v1510 = vsub.f32 %v1423, %v1454
        %v1511 = vsub.f32 %v1424, %v1455
        %v1512 = vsub.f32 %v1425, %v1456
        %v1513 = vsub.f32 %v1426, %v1457
        %v1514 = vsub.f32 %v1427, %v1458
        %v1515 = vsub.f32 %v1428, %v1459
        %v1516 = vsub.f32 %v1429, %v1460
        %v1517 = vsub.f32 %v1430, %v1461
        %v1518 = vadd.f32 %v1502, 1e-05
        %v1519 = vadd.f32 %v1503, 1e-05
        %v1520 = vadd.f32 %v1504, 1e-05
        %v1521 = vadd.f32 %v1505, 1e-05
        %v1522 = vadd.f32 %v1506, 1e-05
        %v1523 = vadd.f32 %v1507, 1e-05
        %v1524 = vadd.f32 %v1508, 1e-05
        %v1525 = vadd.f32 %v1509, 1e-05
        %v1526 = vrsqrt.pop %v1518
        %v1527 = vmul.f32 %v1526, %v1518
        %v1528 = vmul.f32 %v1527, %v1526
        %v1529 = vmul.f32 0.5, %v1528
        %v1530 = vsub.f32 1.5, %v1529
        %v1531 = vmul.f32 %v1526, %v1530
        %vm1532 = vweird.f32 %v1518
        %vm1533 = vweird.f32 %v1526
        %vm1534 = vmor %vm1532, %vm1533
        %v1535 = vsel %vm1534, %v1526, %v1531
        %v1536 = vrsqrt.pop %v1519
        %v1537 = vmul.f32 %v1536, %v1519
        %v1538 = vmul.f32 %v1537, %v1536
        %v1539 = vmul.f32 0.5, %v1538
        %v1540 = vsub.f32 1.5, %v1539
        %v1541 = vmul.f32 %v1536, %v1540
        %vm1542 = vweird.f32 %v1519
        %vm1543 = vweird.f32 %v1536
        %vm1544 = vmor %vm1542, %vm1543
        %v1545 = vsel %vm1544, %v1536, %v1541
        %v1546 = vrsqrt.pop %v1520
        %v1547 = vmul.f32 %v1546, %v1520
        %v1548 = vmul.f32 %v1547, %v1546
        %v1549 = vmul.f32 0.5, %v1548
        %v1550 = vsub.f32 1.5, %v1549
        %v1551 = vmul.f32 %v1546, %v1550
        %vm1552 = vweird.f32 %v1520
        %vm1553 = vweird.f32 %v1546
        %vm1554 = vmor %vm1552, %vm1553
        %v1555 = vsel %vm1554, %v1546, %v1551
        %v1556 = vrsqrt.pop %v1521
        %v1557 = vmul.f32 %v1556, %v1521
        %v1558 = vmul.f32 %v1557, %v1556
        %v1559 = vmul.f32 0.5, %v1558
        %v1560 = vsub.f32 1.5, %v1559
        %v1561 = vmul.f32 %v1556, %v1560
        %vm1562 = vweird.f32 %v1521
        %vm1563 = vweird.f32 %v1556
        %vm1564 = vmor %vm1562, %vm1563
        %v1565 = vsel %vm1564, %v1556, %v1561
        %v1566 = vrsqrt.pop %v1522
        %v1567 = vmul.f32 %v1566, %v1522
        %v1568 = vmul.f32 %v1567, %v1566
        %v1569 = vmul.f32 0.5, %v1568
        %v1570 = vsub.f32 1.5, %v1569
        %v1571 = vmul.f32 %v1566, %v1570
        %vm1572 = vweird.f32 %v1522
        %vm1573 = vweird.f32 %v1566
        %vm1574 = vmor %vm1572, %vm1573
        %v1575 = vsel %vm1574, %v1566, %v1571
        %v1576 = vrsqrt.pop %v1523
        %v1577 = vmul.f32 %v1576, %v1523
        %v1578 = vmul.f32 %v1577, %v1576
        %v1579 = vmul.f32 0.5, %v1578
        %v1580 = vsub.f32 1.5, %v1579
        %v1581 = vmul.f32 %v1576, %v1580
        %vm1582 = vweird.f32 %v1523
        %vm1583 = vweird.f32 %v1576
        %vm1584 = vmor %vm1582, %vm1583
        %v1585 = vsel %vm1584, %v1576, %v1581
        %v1586 = vrsqrt.pop %v1524
        %v1587 = vmul.f32 %v1586, %v1524
        %v1588 = vmul.f32 %v1587, %v1586
        %v1589 = vmul.f32 0.5, %v1588
        %v1590 = vsub.f32 1.5, %v1589
        %v1591 = vmul.f32 %v1586, %v1590
        %vm1592 = vweird.f32 %v1524
        %vm1593 = vweird.f32 %v1586
        %vm1594 = vmor %vm1592, %vm1593
        %v1595 = vsel %vm1594, %v1586, %v1591
        %v1596 = vrsqrt.pop %v1525
        %v1597 = vmul.f32 %v1596, %v1525
        %v1598 = vmul.f32 %v1597, %v1596
        %v1599 = vmul.f32 0.5, %v1598
        %v1600 = vsub.f32 1.5, %v1599
        %v1601 = vmul.f32 %v1596, %v1600
        %vm1602 = vweird.f32 %v1525
        %vm1603 = vweird.f32 %v1596
        %vm1604 = vmor %vm1602, %vm1603
        %v1605 = vsel %vm1604, %v1596, %v1601
        %v1606 = vmul.f32 %v1510, %v1535
        %v1607 = vmul.f32 %v1511, %v1545
        %v1608 = vmul.f32 %v1512, %v1555
        %v1609 = vmul.f32 %v1513, %v1565
        %v1610 = vmul.f32 %v1514, %v1575
        %v1611 = vmul.f32 %v1515, %v1585
        %v1612 = vmul.f32 %v1516, %v1595
        %v1613 = vmul.f32 %v1517, %v1605
        %v1614 = vld [vmem:[%s2 + $0x4] ss:$0 sm:$0xff]
        %v1615 = vmul.f32 %v1606, %v1614
        %v1616 = vmul.f32 %v1607, %v1614
        %v1617 = vmul.f32 %v1608, %v1614
        %v1618 = vmul.f32 %v1609, %v1614
        %v1619 = vmul.f32 %v1610, %v1614
        %v1620 = vmul.f32 %v1611, %v1614
        %v1621 = vmul.f32 %v1612, %v1614
        %v1622 = vmul.f32 %v1613, %v1614
        %v1623 = vld [vmem:[%s2 + $0x5] ss:$0 sm:$0xff]
        %v1624 = vadd.f32 %v1615, %v1623
        %v1625 = vadd.f32 %v1616, %v1623
        %v1626 = vadd.f32 %v1617, %v1623
        %v1627 = vadd.f32 %v1618, %v1623
        %v1628 = vadd.f32 %v1619, %v1623
        %v1629 = vadd.f32 %v1620, %v1623
        %v1630 = vadd.f32 %v1621, %v1623
        %v1631 = vadd.f32 %v1622, %v1623
        %v1632 = vld [vmem:[%s2 + $0x6] ss:$0 sm:$0xff]
        %v1633 = vmul.f32 %v1624, %v1632
        %v1634 = vmul.f32 %v1625, %v1632
        %v1635 = vmul.f32 %v1626, %v1632
        %v1636 = vmul.f32 %v1627, %v1632
        %v1637 = vmul.f32 %v1628, %v1632
        %v1638 = vmul.f32 %v1629, %v1632
        %v1639 = vmul.f32 %v1630, %v1632
        %v1640 = vmul.f32 %v1631, %v1632
        %1641 = vadd.xlane.f32.xlu0 %v1633
        %v1642 = vpop.xlane.xlu0 %1641
        %1643 = vadd.xlane.f32.xlu0 %v1634
        %v1644 = vpop.xlane.xlu0 %1643
        %1645 = vadd.xlane.f32.xlu0 %v1635
        %v1646 = vpop.xlane.xlu0 %1645
        %1647 = vadd.xlane.f32.xlu0 %v1636
        %v1648 = vpop.xlane.xlu0 %1647
        %1649 = vadd.xlane.f32.xlu0 %v1637
        %v1650 = vpop.xlane.xlu0 %1649
        %1651 = vadd.xlane.f32.xlu0 %v1638
        %v1652 = vpop.xlane.xlu0 %1651
        %1653 = vadd.xlane.f32.xlu0 %v1639
        %v1654 = vpop.xlane.xlu0 %1653
        %1655 = vadd.xlane.f32.xlu0 %v1640
        %v1656 = vpop.xlane.xlu0 %1655
        %v1657 = vstv %s340
        %v1658 = vadd.f32 %v1642, %v1657
        %v1659 = vadd.f32 %v1644, %v1657
        %v1660 = vadd.f32 %v1646, %v1657
        %v1661 = vadd.f32 %v1648, %v1657
        %v1662 = vadd.f32 %v1650, %v1657
        %v1663 = vadd.f32 %v1652, %v1657
        %v1664 = vadd.f32 %v1654, %v1657
        %v1665 = vadd.f32 %v1656, %v1657
        %1666 = vst.msk [vmem:[%s316] sm:$0xff] %vm472, %v1658
        %1667 = vst.msk [vmem:[%s316 + $0x8] sm:$0xff] %vm472, %v1659
        %1668 = vst.msk [vmem:[%s316 + $0x10] sm:$0xff] %vm472, %v1660
        %1669 = vst.msk [vmem:[%s316 + $0x18] sm:$0xff] %vm472, %v1661
        %1670 = vst.msk [vmem:[%s316 + $0x20] sm:$0xff] %vm472, %v1662
        %1671 = vst.msk [vmem:[%s316 + $0x28] sm:$0xff] %vm472, %v1663
        %1672 = vst.msk [vmem:[%s316 + $0x30] sm:$0xff] %vm472, %v1664
        %1673 = vst.msk [vmem:[%s316 + $0x38] sm:$0xff] %vm472, %v1665
        %s1674 = sand.u32 %s180, 1
        %s1675 = sand.u32 %s180, 1
        %s1676 = smul.addr %s1675, 64
        %s1677 = scalar_lea.vmem [#allocation6], %s1676
        // Predicated region
        $region57: #{mlp_attention_forward.1} parent=47 // pred_check
          %p1678 = pneg %p190
        $region58: #{mlp_attention_forward.1} parent=47 // pred_check_branch
          %1680 = sbr.rel (%p1678) target = $region60
        $region59: #{mlp_attention_forward.1} parent=47 // pred_region
          %s1681 = smul.u32 8, %s20
          %s1682 = ssub.s32 25, %s1681
          %p1683 = scmp.lt.s32.totalorder %s1682, 8
          %s1684 = scalar_select %p1683, %s1682, 8
          %s1685 = smul.u32 8, %s1684
          %p1686 = scmp.ne.s32.totalorder 0, %s1685
          %s1687 = smul.addr %s1681, 8
          %s1688 = scalar_lea.vmem %s7, %s1687
          // Predicated region
          $region61: #{mlp_attention_forward.1} parent=59 // pred_check
            %p1689 = pneg %p1686
          $region62: #{mlp_attention_forward.1} parent=59 // pred_check_branch
            %1691 = sbr.rel (%p1689) target = $region64
          $region63: #{mlp_attention_forward.1} parent=59 // pred_region
            // Predicated region
            $region65: #{mlp_attention_forward.1} parent=63 // pred_check
              _
            $region66: #{mlp_attention_forward.1} parent=63 // pred_check_branch
              %1693 = sbr.rel (0) target = $region68
            $region67: #{mlp_attention_forward.1} parent=63 // pred_region
              // Predicated region
              $region87: #{mlp_attention_forward.1} parent=67 // pred_check
                _
              $region88: #{mlp_attention_forward.1} parent=67 // pred_check_branch
                %1757 = sbr.rel (0) target = $region90
              $region89: #{mlp_attention_forward.1} parent=67 // pred_region
                %s1758 = sshrl.u32 %s1684, 3
                // While loop
                $region91: #{mlp_attention_forward.1} parent=89 // loop_pre_header
                  _
                $region92: #{mlp_attention_forward.1} parent=89 // loop_header
                  %s1760 = sphi 0, %s1762
                  %p1761 = scmp.ge.s32.totalorder %s1760, %s1758
                  %s1765 = sphi 0, %s1786
                  %s1766 = sphi %s1677, %s1789
                  %s1767 = sphi %s1688, %s1790
                $region93: #{mlp_attention_forward.1} parent=89 // loop_header_branch
                  %1764 = sbr.rel (%p1761) target = $region97
                $region94: #{mlp_attention_forward.1} parent=89 // loop_body
                  %v1768 = vld [vmem:[%s1766] sm:$0xff]
                  %1769 = vst [vmem:[%s1767] sm:$0xff] %v1768
                  %v1770 = vld [vmem:[%s1766 + $0x8] sm:$0xff]
                  %1771 = vst [vmem:[%s1767 + $0x8] sm:$0xff] %v1770
                  %v1772 = vld [vmem:[%s1766 + $0x10] sm:$0xff]
                  %1773 = vst [vmem:[%s1767 + $0x10] sm:$0xff] %v1772
                  %v1774 = vld [vmem:[%s1766 + $0x18] sm:$0xff]
                  %1775 = vst [vmem:[%s1767 + $0x18] sm:$0xff] %v1774
                  %v1776 = vld [vmem:[%s1766 + $0x20] sm:$0xff]
                  %1777 = vst [vmem:[%s1767 + $0x20] sm:$0xff] %v1776
                  %v1778 = vld [vmem:[%s1766 + $0x28] sm:$0xff]
                  %1779 = vst [vmem:[%s1767 + $0x28] sm:$0xff] %v1778
                  %v1780 = vld [vmem:[%s1766 + $0x30] sm:$0xff]
                  %1781 = vst [vmem:[%s1767 + $0x30] sm:$0xff] %v1780
                  %v1782 = vld [vmem:[%s1766 + $0x38] sm:$0xff]
                  %1783 = vst [vmem:[%s1767 + $0x38] sm:$0xff] %v1782
                  %s1784 = sadd.s32 1, %s1765
                  %p1785 = scmp.ge.s32.totalorder %s1784, %s1758
                  %s1786 = scalar_select %p1785, 0, %s1784
                  %s1787 = smul.u32 %s1786, 64
                  %s1788 = smul.u32 %s1786, 64
                  %s1789 = scalar_lea.vmem %s1677, %s1787 [#allocation6]
                  %s1790 = scalar_lea.vmem %s1688, %s1788
                $region95: #{mlp_attention_forward.1} parent=89 // loop_footer
                  %s1762 = sadd.s32 %s1760, 1
                $region96: #{mlp_attention_forward.1} parent=89 // loop_footer_branch
                  %1759 = sbr.rel target = $region92
                $region97: #{mlp_attention_forward.1} parent=89 // loop_exit
                  _
                %s1791 = sshrl.u32 %s1684, 3
                %s1792 = sand.u32 %s1684, 7
                %s1793 = smul.u32 %s1791, 8
                %s1794 = smul.u32 8, %s1793
                %s1795 = scalar_lea.vmem %s1677, %s1794 [#allocation6]
                %s1796 = smul.u32 8, %s1793
                %s1797 = scalar_lea.vmem %s1688, %s1796
                // While loop
                $region98: #{mlp_attention_forward.1} parent=89 // loop_pre_header
                  _
                $region99: #{mlp_attention_forward.1} parent=89 // loop_header
                  %s1799 = sphi 0, %s1801
                  %p1800 = scmp.ge.s32.totalorder %s1799, %s1792
                  %s1804 = sphi 0, %s1811
                  %s1805 = sphi %s1795, %s1814
                  %s1806 = sphi %s1797, %s1815
                $region100: #{mlp_attention_forward.1} parent=89 // loop_header_branch
                  %1803 = sbr.rel (%p1800) target = $region104
                $region101: #{mlp_attention_forward.1} parent=89 // loop_body
                  %v1807 = vld [vmem:[%s1805] sm:$0xff]
                  %1808 = vst [vmem:[%s1806] sm:$0xff] %v1807
                  %s1809 = sadd.s32 1, %s1804
                  %p1810 = scmp.ge.s32.totalorder %s1809, %s1792
                  %s1811 = scalar_select %p1810, 0, %s1809
                  %s1812 = smul.u32 %s1811, 8
                  %s1813 = smul.u32 %s1811, 8
                  %s1814 = scalar_lea.vmem %s1795, %s1812 [#allocation6]
                  %s1815 = scalar_lea.vmem %s1797, %s1813
                $region102: #{mlp_attention_forward.1} parent=89 // loop_footer
                  %s1801 = sadd.s32 %s1799, 1
                $region103: #{mlp_attention_forward.1} parent=89 // loop_footer_branch
                  %1798 = sbr.rel target = $region99
                $region104: #{mlp_attention_forward.1} parent=89 // loop_exit
                  _
              $region90: #{mlp_attention_forward.1} parent=67 // pred_fallthru
                _
              // Predicated region
              $region105: #{mlp_attention_forward.1} parent=67 // pred_check
                _
              $region106: #{mlp_attention_forward.1} parent=67 // pred_check_branch
                %1817 = sbr.rel target = $region108
              $region107: #{mlp_attention_forward.1} parent=67 // pred_region
                _
              $region108: #{mlp_attention_forward.1} parent=67 // pred_fallthru
                _
            $region68: #{mlp_attention_forward.1} parent=63 // pred_fallthru
              _
            // Predicated region
            $region69: #{mlp_attention_forward.1} parent=63 // pred_check
              _
            $region70: #{mlp_attention_forward.1} parent=63 // pred_check_branch
              %1695 = sbr.rel target = $region72
            $region71: #{mlp_attention_forward.1} parent=63 // pred_region
              %s1697 = ssub.s32 256, 1
              %s1698 = sshrl.u32 %s1684, 3
              // While loop
              $region73: #{mlp_attention_forward.1} parent=71 // loop_pre_header
                _
              $region74: #{mlp_attention_forward.1} parent=71 // loop_header
                %s1700 = sphi 0, %s1702
                %p1701 = scmp.ge.s32.totalorder %s1700, %s1698
                %s1705 = sphi 0, %s1726
                %s1706 = sphi %s1677, %s1729
                %s1707 = sphi %s1688, %s1730
              $region75: #{mlp_attention_forward.1} parent=71 // loop_header_branch
                %1704 = sbr.rel (%p1701) target = $region79
              $region76: #{mlp_attention_forward.1} parent=71 // loop_body
                %v1708 = vld [vmem:[%s1706] sm:%s1697]
                %1709 = vst [vmem:[%s1707] sm:%s1697] %v1708
                %v1710 = vld [vmem:[%s1706 + $0x8] sm:%s1697]
                %1711 = vst [vmem:[%s1707 + $0x8] sm:%s1697] %v1710
                %v1712 = vld [vmem:[%s1706 + $0x10] sm:%s1697]
                %1713 = vst [vmem:[%s1707 + $0x10] sm:%s1697] %v1712
                %v1714 = vld [vmem:[%s1706 + $0x18] sm:%s1697]
                %1715 = vst [vmem:[%s1707 + $0x18] sm:%s1697] %v1714
                %v1716 = vld [vmem:[%s1706 + $0x20] sm:%s1697]
                %1717 = vst [vmem:[%s1707 + $0x20] sm:%s1697] %v1716
                %v1718 = vld [vmem:[%s1706 + $0x28] sm:%s1697]
                %1719 = vst [vmem:[%s1707 + $0x28] sm:%s1697] %v1718
                %v1720 = vld [vmem:[%s1706 + $0x30] sm:%s1697]
                %1721 = vst [vmem:[%s1707 + $0x30] sm:%s1697] %v1720
                %v1722 = vld [vmem:[%s1706 + $0x38] sm:%s1697]
                %1723 = vst [vmem:[%s1707 + $0x38] sm:%s1697] %v1722
                %s1724 = sadd.s32 1, %s1705
                %p1725 = scmp.ge.s32.totalorder %s1724, %s1698
                %s1726 = scalar_select %p1725, 0, %s1724
                %s1727 = smul.u32 %s1726, 64
                %s1728 = smul.u32 %s1726, 64
                %s1729 = scalar_lea.vmem %s1677, %s1727 [#allocation6]
                %s1730 = scalar_lea.vmem %s1688, %s1728
              $region77: #{mlp_attention_forward.1} parent=71 // loop_footer
                %s1702 = sadd.s32 %s1700, 1
              $region78: #{mlp_attention_forward.1} parent=71 // loop_footer_branch
                %1699 = sbr.rel target = $region74
              $region79: #{mlp_attention_forward.1} parent=71 // loop_exit
                _
              %s1731 = sshrl.u32 %s1684, 3
              %s1732 = sand.u32 %s1684, 7
              %s1733 = smul.u32 %s1731, 8
              %s1734 = smul.u32 8, %s1733
              %s1735 = scalar_lea.vmem %s1677, %s1734 [#allocation6]
              %s1736 = smul.u32 8, %s1733
              %s1737 = scalar_lea.vmem %s1688, %s1736
              // While loop
              $region80: #{mlp_attention_forward.1} parent=71 // loop_pre_header
                _
              $region81: #{mlp_attention_forward.1} parent=71 // loop_header
                %s1739 = sphi 0, %s1741
                %p1740 = scmp.ge.s32.totalorder %s1739, %s1732
                %s1744 = sphi 0, %s1751
                %s1745 = sphi %s1735, %s1754
                %s1746 = sphi %s1737, %s1755
              $region82: #{mlp_attention_forward.1} parent=71 // loop_header_branch
                %1743 = sbr.rel (%p1740) target = $region86
              $region83: #{mlp_attention_forward.1} parent=71 // loop_body
                %v1747 = vld [vmem:[%s1745] sm:%s1697]
                %1748 = vst [vmem:[%s1746] sm:%s1697] %v1747
                %s1749 = sadd.s32 1, %s1744
                %p1750 = scmp.ge.s32.totalorder %s1749, %s1732
                %s1751 = scalar_select %p1750, 0, %s1749
                %s1752 = smul.u32 %s1751, 8
                %s1753 = smul.u32 %s1751, 8
                %s1754 = scalar_lea.vmem %s1735, %s1752 [#allocation6]
                %s1755 = scalar_lea.vmem %s1737, %s1753
              $region84: #{mlp_attention_forward.1} parent=71 // loop_footer
                %s1741 = sadd.s32 %s1739, 1
              $region85: #{mlp_attention_forward.1} parent=71 // loop_footer_branch
                %1738 = sbr.rel target = $region81
              $region86: #{mlp_attention_forward.1} parent=71 // loop_exit
                _
            $region72: #{mlp_attention_forward.1} parent=63 // pred_fallthru
              _
          $region64: #{mlp_attention_forward.1} parent=59 // pred_fallthru
            _
          %1818 = vnop
        $region60: #{mlp_attention_forward.1} parent=47 // pred_fallthru
          _
      $region48: #{mlp_attention_forward.1} parent=5 // pred_fallthru
        _
      %p1819 = scmp.le.s32.totalorder 2, %s15
      // Predicated region
      $region109: #{mlp_attention_forward.1} parent=5 // pred_check
        %p1820 = pneg %p1819
      $region110: #{mlp_attention_forward.1} parent=5 // pred_check_branch
        %1822 = sbr.rel (%p1820) target = $region112
      $region111: #{mlp_attention_forward.1} parent=5 // pred_region
        %s1823 = ssub.s32 %s15, 2
        // Predicated region
        $region113: #{mlp_attention_forward.1} parent=111 // pred_check
          %p1824 = pneg %p196
        $region114: #{mlp_attention_forward.1} parent=111 // pred_check_branch
          %1826 = sbr.rel (%p1824) target = $region116
        $region115: #{mlp_attention_forward.1} parent=111 // pred_region
          %s1827 = sand.u32 %s181, 1
          %s1828 = sand.u32 %s181, 1
          %s1829 = smul.addr %s1828, 64
          %s1830 = scalar_lea.vmem [#allocation6], %s1829
        $region116: #{mlp_attention_forward.1} parent=111 // pred_fallthru
          _
      $region112: #{mlp_attention_forward.1} parent=5 // pred_fallthru
        _
    $region6: #{mlp_attention_forward.1} parent=1 // loop_footer
      %s19 = sadd.s32 1, %s15
    $region7: #{mlp_attention_forward.1} parent=1 // loop_footer_branch
      %14 = sbr.rel target = $region3
    $region8: #{mlp_attention_forward.1} parent=1 // loop_exit
      _
    %1831 = vsyncpa [#allocation3], 1
    %s1832 = scalar_lea.sflag [#allocation3], 1
    %1833 = vsyncpa %s1832, 1
    %1834 = vsyncpa [#allocation4], 1
    %s1835 = scalar_lea.sflag [#allocation4], 1
    %1836 = vsyncpa %s1835, 1

</llo_original>
